<compile_context>
chip_gen: v6e
topology: v6e:2x2x1
jax: 0.10.0
libtpu: 0.0.40
codegen_flags: <defaults>
</compile_context>

<pallas_src>
import functools

import jax
import jax.numpy as jnp
from jax import lax
from jax.experimental import pallas as pl
from jax.experimental.pallas import tpu as pltpu


# ---------------------------------------------------------------------------
# Fused kernel: (zero-pad + im2col + conv-matmul + bias + GroupNorm + ReLU)
# for one grid step of B batch elements.
#   x_ref:      (B, IC, H, W)   f32  raw input block
#   w_ref:      (OC, Kp)        bf16 conv weight, K ordered (kh, kw, ic)
#   params_ref: (OC, 3)         f32  [bias | gamma | beta]
#   gmat_ref:   (OC, OC)        f32  block-diag group matrix / (cg*HW)
#   o_ref:      (B, OC, HW)     out  (reshapes straight to NCHW in wrapper)
#   xp_scr:     (B, IC, Hp, Wp) f32  zero-padded input scratch
#   patch_scr:  (Kp, B*HW)      bf16 im2col patch slab scratch
# ---------------------------------------------------------------------------
def _cgr_kernel(x_ref, w_ref, params_ref, gmat_ref, o_ref, xp_scr, patch_scr, *,
                b, ic, h, w, ho, wo, kh, kw, stride, dilation, padding,
                hw, k, kp, eps):
    f32 = jnp.float32

    # --- in-kernel zero padding of the input block -------------------------
    # Re-zeroed every step: VMEM scratch is per-core and the "parallel" grid
    # may split steps across TensorCores, so a program_id==0 init is unsafe.
    if padding > 0:
        xp_scr[...] = jnp.zeros_like(xp_scr)
    xp_scr[:, :, padding:padding + h, padding:padding + w] = x_ref[...]

    # --- zero the K-padding rows of the patch slab (avoid 0 * garbage) -----
    if kp > k:
        patch_scr[...] = jnp.zeros_like(patch_scr)

    # --- fused im2col: assemble the (Kp, B*HW) bf16 patch slab in VMEM -----
    # Each tap is a static slice of the padded scratch; the (IC, Ho, Wo) ->
    # (IC, HW) reshape is a small in-VMEM relayout (no HBM traffic).
    for bi in range(b):
        for i in range(kh):
            for j in range(kw):
                t = i * kw + j
                hi = i * dilation
                wi = j * dilation
                if stride == 1:
                    tap = xp_scr[bi, :, pl.ds(hi, ho), pl.ds(wi, wo)]
                else:
                    tap = xp_scr[bi, :, pl.ds(hi, ho, stride),
                                 pl.ds(wi, wo, stride)]
                patch_scr[t * ic:(t + 1) * ic, bi * hw:(bi + 1) * hw] = (
                    tap.reshape(ic, hw).astype(patch_scr.dtype))

    bias = params_ref[:, 0:1]                              # (OC, 1)
    gamma = params_ref[:, 1:2]
    beta = params_ref[:, 2:3]

    # --- convolution as one MXU matmul (bf16 in, f32 accumulate) + bias ----
    y = jnp.dot(w_ref[...], patch_scr[...],
                preferred_element_type=f32) + bias          # (OC, B*HW)

    # --- GroupNorm stats: per-batch lane reductions, one group matmul ------
    # y columns [bi*HW, (bi+1)*HW) are 256-lane aligned slices (cheap).
    cols = []
    ybs = []
    for bi in range(b):
        yb = y[:, bi * hw:(bi + 1) * hw]                    # (OC, HW)
        ybs.append(yb)
        cols.append(jnp.sum(yb, axis=1, keepdims=True))     # sum
        cols.append(jnp.sum(yb * yb, axis=1, keepdims=True))  # sum of squares
    stats = jnp.concatenate(cols, axis=1)                   # (OC, 2B)
    # gmat is pre-scaled by 1/(cg*HW): a single dot yields per-channel
    # [mean, E[y^2]] (already broadcast back to all channels of the group).
    gstats = jnp.dot(gmat_ref[...], stats, preferred_element_type=f32)

    # --- folded affine + ReLU, per batch ------------------------------------
    for bi in range(b):
        mean = gstats[:, 2 * bi:2 * bi + 1]                 # (OC, 1)
        ey2 = gstats[:, 2 * bi + 1:2 * bi + 2]              # (OC, 1)
        var = jnp.maximum(ey2 - mean * mean, 0.0)           # clamp cancellation
        a = lax.rsqrt(var + f32(eps)) * gamma               # (OC, 1)
        bb = beta - mean * a                                 # (OC, 1)
        o_ref[bi] = jnp.maximum(ybs[bi] * a + bb, 0.0).astype(o_ref.dtype)


# ---------------------------------------------------------------------------
# Wrapper: no im2col, no pad, no transpose in XLA -- just the pallas_call.
# ---------------------------------------------------------------------------
def conv2d_groupnorm_relu(x, weight, bias, gamma, beta, *,
                          stride=1, padding=1, dilation=1, n_groups=16,
                          eps=1e-5, batches_per_step=None,
                          out_dtype=jnp.float32):
    """x: (N, IC, H, W) NCHW.  weight: (OC, IC, KH, KW).  Returns (N, OC, Ho, Wo)."""
    n, ic, h, w = x.shape
    oc, ic2, kh, kw = weight.shape
    assert ic2 == ic
    ho = (h + 2 * padding - dilation * (kh - 1) - 1) // stride + 1
    wo = (w + 2 * padding - dilation * (kw - 1) - 1) // stride + 1
    hw = ho * wo
    hp = h + 2 * padding
    wp = w + 2 * padding
    k = kh * kw * ic
    kp = ((k + 15) // 16) * 16          # dense bf16 sublane tiles for the MXU
    assert oc % n_groups == 0
    cg = oc // n_groups

    # Batches per grid step: pack to amortize the ~0.35us/step fixed overhead,
    # but keep >= 2 grid steps when N >= 2 (v7x has 2 TensorCores).
    if batches_per_step is None:
        batches_per_step = 1
        for d in range(1, n + 1):
            if n % d == 0 and n // d >= 2 and d * hw <= 2048:
                batches_per_step = d
    b = batches_per_step
    assert n % b == 0, (n, b)
    grid = (n // b,)

    if x.dtype != jnp.float32:
        x = x.astype(jnp.float32)

    # Weight: K ordered (kh, kw, ic) to match the in-kernel slab layout; the
    # (tiny, constant) weight is cast to bf16 once in the wrapper.
    w2 = jnp.transpose(weight, (0, 2, 3, 1)).reshape(oc, k)
    w2 = jnp.pad(w2, ((0, 0), (0, kp - k))).astype(jnp.bfloat16)

    # Single (OC, 3) parameter slab [bias | gamma | beta] in f32.
    params = jnp.stack([bias, gamma, beta], axis=1).astype(jnp.float32)

    # Block-diagonal group matrix, pre-scaled by 1/(cg*HW): one dot gives
    # per-channel [mean, E[y^2]]. Constant index_map -> DMA'd once.
    grp = jnp.arange(oc, dtype=jnp.int32) // cg
    gmat = (grp[:, None] == grp[None, :]).astype(jnp.float32) / float(cg * hw)

    kernel = functools.partial(
        _cgr_kernel, b=b, ic=ic, h=h, w=w, ho=ho, wo=wo, kh=kh, kw=kw,
        stride=stride, dilation=dilation, padding=padding, hw=hw, k=k, kp=kp,
        eps=eps)

    out_bytes = jnp.dtype(out_dtype).itemsize
    cost = pl.CostEstimate(
        flops=2 * n * oc * kp * hw        # conv matmul
              + 4 * n * oc * oc           # group-stats matmul
              + 8 * n * oc * hw,          # stats + affine + relu (approx)
        transcendentals=n * oc,           # rsqrt
        bytes_accessed=(n * ic * h * w * 4       # input (f32, once per batch)
                        + oc * kp * 2            # weight (bf16, DMA'd once)
                        + oc * 3 * 4             # params (once)
                        + oc * oc * 4            # group matrix (once)
                        + n * oc * hw * out_bytes),  # output
    )

    out = pl.pallas_call(
        kernel,
        out_shape=jax.ShapeDtypeStruct((n, oc, hw), out_dtype),
        grid_spec=pltpu.PrefetchScalarGridSpec(
            num_scalar_prefetch=0,
            grid=grid,
            in_specs=[
                pl.BlockSpec((b, ic, h, w), lambda g: (g, 0, 0, 0)),   # input
                pl.BlockSpec((oc, kp), lambda g: (0, 0)),              # weight
                pl.BlockSpec((oc, 3), lambda g: (0, 0)),               # params
                pl.BlockSpec((oc, oc), lambda g: (0, 0)),              # group mat
            ],
            out_specs=pl.BlockSpec((b, oc, hw), lambda g: (g, 0, 0)),
            scratch_shapes=[
                pltpu.VMEM((b, ic, hp, wp), jnp.float32),   # padded input
                pltpu.VMEM((kp, b * hw), jnp.bfloat16),     # im2col patch slab
            ],
        ),
        compiler_params=pltpu.CompilerParams(
            dimension_semantics=("parallel",)),
        cost_estimate=cost,
    )(x, w2, params, gmat)

    # (N, OC, HW) is already channel-major: reshape straight to NCHW.
    return out.reshape(n, oc, ho, wo)


# ---------------------------------------------------------------------------
# Pure-JAX f32 reference (mirrors nn.Conv2d + nn.GroupNorm + ReLU).
# ---------------------------------------------------------------------------
def _reference(x, weight, bias, gamma, beta, *, stride, padding, dilation,
               n_groups, eps=1e-5):
    y = lax.conv_general_dilated(
        x, weight, (stride, stride), [(padding, padding), (padding, padding)],
        rhs_dilation=(dilation, dilation),
        dimension_numbers=("NCHW", "OIHW", "NCHW"))
    y = y + bias[None, :, None, None]
    n, oc, h, w = y.shape
    cg = oc // n_groups
    yr = y.reshape(n, n_groups, cg, h, w)
    mean = yr.mean(axis=(2, 3, 4), keepdims=True)
    var = yr.var(axis=(2, 3, 4), keepdims=True)
    yn = ((yr - mean) / jnp.sqrt(var + eps)).reshape(n, oc, h, w)
    yn = yn * gamma[None, :, None, None] + beta[None, :, None, None]
    return jnp.maximum(yn, 0.0)


if __name__ == "__main__":
    # Module config: conv2DGroupNormRelu(in_channels=4, n_filters=32,
    #   k_size=3, stride=1, padding=1, bias=True, dilation=1, n_groups=16)
    N, IC, H, W = 2, 4, 16, 16
    OC, K, STRIDE, PAD, DIL, NG = 32, 3, 1, 1, 1, 16

    key = jax.random.PRNGKey(0)
    kx, kwt, kb, kg, kbe = jax.random.split(key, 5)
    x = jax.random.normal(kx, (N, IC, H, W), dtype=jnp.float32)
    weight = jax.random.normal(kwt, (OC, IC, K, K), dtype=jnp.float32) * 0.1
    bias = jax.random.normal(kb, (OC,), dtype=jnp.float32) * 0.1
    gamma = 1.0 + 0.1 * jax.random.normal(kg, (OC,), dtype=jnp.float32)
    beta = 0.1 * jax.random.normal(kbe, (OC,), dtype=jnp.float32)

    out = conv2d_groupnorm_relu(x, weight, bias, gamma, beta,
                                stride=STRIDE, padding=PAD, dilation=DIL,
                                n_groups=NG)
    out = jax.block_until_ready(out)

    ref = _reference(x, weight, bias, gamma, beta, stride=STRIDE, padding=PAD,
                     dilation=DIL, n_groups=NG)
    assert out.shape == (N, OC, H, W), out.shape
    # bf16 MXU inputs vs. a pure-f32 reference -> loosened tolerance.
    assert jnp.allclose(out, ref, atol=5e-2, rtol=5e-2), \
        float(jnp.max(jnp.abs(out - ref)))

    # Also exercise the batch-packed path (N=4 -> 2 batches per grid step,
    # 2 parallel grid steps).
    x4 = jax.random.normal(kx, (4, IC, H, W), dtype=jnp.float32)
    out4 = conv2d_groupnorm_relu(x4, weight, bias, gamma, beta,
                                 stride=STRIDE, padding=PAD, dilation=DIL,
                                 n_groups=NG)
    out4 = jax.block_until_ready(out4)
    ref4 = _reference(x4, weight, bias, gamma, beta, stride=STRIDE,
                      padding=PAD, dilation=DIL, n_groups=NG)
    assert out4.shape == (4, OC, H, W), out4.shape
    assert jnp.allclose(out4, ref4, atol=5e-2, rtol=5e-2), \
        float(jnp.max(jnp.abs(out4 - ref4)))

    print("KERNEL_OK")
</pallas_src>

<mosaic_0001>
module attributes {stable_mosaic.version = 11 : i64} {
  func.func @_cgr_kernel(%arg0: i32, %arg1: memref<1x4x16x16xf32, #tpu.memory_space<vmem>>, %arg2: memref<32x48xbf16, #tpu.memory_space<vmem>>, %arg3: memref<32x3xf32, #tpu.memory_space<vmem>>, %arg4: memref<32x32xf32, #tpu.memory_space<vmem>>, %arg5: memref<1x32x256xf32, #tpu.memory_space<vmem>>, %arg6: memref<1x4x18x18xf32, #tpu.memory_space<vmem>>, %arg7: memref<48x256xbf16, #tpu.memory_space<vmem>>) attributes {dimension_semantics = [#tpu.dimension_semantics<parallel>], iteration_bounds = array<i64: 2>, scalar_prefetch = 0 : i64, scratch_operands = 2 : i64, tpu.core_type = #tpu.core_type<tc>, window_params = [{transform_indices = @transform_0, window_bounds = array<i64: 1, 4, 16, 16>}, {pipeline_mode = #tpu.pipeline_mode<synchronous>, transform_indices = @transform_1, window_bounds = array<i64: 32, 48>}, {pipeline_mode = #tpu.pipeline_mode<synchronous>, transform_indices = @transform_2, window_bounds = array<i64: 32, 3>}, {pipeline_mode = #tpu.pipeline_mode<synchronous>, transform_indices = @transform_3, window_bounds = array<i64: 32, 32>}, {transform_indices = @transform_4, window_bounds = array<i64: 1, 32, 256>}]} {
    %cst = arith.constant 0.000000e+00 : f32
    %0 = vector.broadcast %cst : f32 to vector<1x4x18x18xf32>
    %c0 = arith.constant 0 : index
    %c0_0 = arith.constant 0 : index
    %c0_1 = arith.constant 0 : index
    %c0_2 = arith.constant 0 : index
    %1 = vector.load %arg6[%c0, %c0_0, %c0_1, %c0_2] : memref<1x4x18x18xf32, #tpu.memory_space<vmem>>, vector<1x4x18x18xf32>
    tpu.vector_store %arg6[%c0, %c0_0, %c0_1, %c0_2], %0 {strides = array<i32>} : memref<1x4x18x18xf32, #tpu.memory_space<vmem>>, vector<1x4x18x18xf32>,
    %c0_3 = arith.constant 0 : index
    %c0_4 = arith.constant 0 : index
    %c0_5 = arith.constant 0 : index
    %c0_6 = arith.constant 0 : index
    %2 = vector.load %arg1[%c0_3, %c0_4, %c0_5, %c0_6] : memref<1x4x16x16xf32, #tpu.memory_space<vmem>>, vector<1x4x16x16xf32>
    %c0_7 = arith.constant 0 : index
    %c0_8 = arith.constant 0 : index
    %c1 = arith.constant 1 : index
    %c1_9 = arith.constant 1 : index
    %3 = vector.load %arg6[%c0_7, %c0_8, %c1, %c1_9] : memref<1x4x18x18xf32, #tpu.memory_space<vmem>>, vector<1x4x16x16xf32>
    tpu.vector_store %arg6[%c0_7, %c0_8, %c1, %c1_9], %2 {strides = array<i32>} : memref<1x4x18x18xf32, #tpu.memory_space<vmem>>, vector<1x4x16x16xf32>,
    %cst_10 = arith.constant 0.000000e+00 : bf16
    %4 = vector.broadcast %cst_10 : bf16 to vector<48x256xbf16>
    %c0_11 = arith.constant 0 : index
    %c0_12 = arith.constant 0 : index
    %5 = vector.load %arg7[%c0_11, %c0_12] : memref<48x256xbf16, #tpu.memory_space<vmem>>, vector<48x256xbf16>
    tpu.vector_store %arg7[%c0_11, %c0_12], %4 {strides = array<i32>} : memref<48x256xbf16, #tpu.memory_space<vmem>>, vector<48x256xbf16>,
    %c0_13 = arith.constant 0 : index
    %c0_14 = arith.constant 0 : index
    %c0_15 = arith.constant 0 : index
    %c0_16 = arith.constant 0 : index
    %6 = vector.load %arg6[%c0_13, %c0_14, %c0_15, %c0_16] : memref<1x4x18x18xf32, #tpu.memory_space<vmem>>, vector<1x4x16x16xf32>
    %7 = vector.shape_cast %6 : vector<1x4x16x16xf32> to vector<4x16x16xf32>
    %8 = vector.shape_cast %7 : vector<4x16x16xf32> to vector<4x256xf32>
    %9 = arith.truncf %8 : vector<4x256xf32> to vector<4x256xbf16>
    %c0_17 = arith.constant 0 : index
    %c0_18 = arith.constant 0 : index
    %10 = vector.load %arg7[%c0_17, %c0_18] : memref<48x256xbf16, #tpu.memory_space<vmem>>, vector<4x256xbf16>
    tpu.vector_store %arg7[%c0_17, %c0_18], %9 {strides = array<i32>} : memref<48x256xbf16, #tpu.memory_space<vmem>>, vector<4x256xbf16>,
    %c0_19 = arith.constant 0 : index
    %c0_20 = arith.constant 0 : index
    %c0_21 = arith.constant 0 : index
    %c1_22 = arith.constant 1 : index
    %11 = vector.load %arg6[%c0_19, %c0_20, %c0_21, %c1_22] : memref<1x4x18x18xf32, #tpu.memory_space<vmem>>, vector<1x4x16x16xf32>
    %12 = vector.shape_cast %11 : vector<1x4x16x16xf32> to vector<4x16x16xf32>
    %13 = vector.shape_cast %12 : vector<4x16x16xf32> to vector<4x256xf32>
    %14 = arith.truncf %13 : vector<4x256xf32> to vector<4x256xbf16>
    %c4 = arith.constant 4 : index
    %c0_23 = arith.constant 0 : index
    %15 = vector.load %arg7[%c4, %c0_23] : memref<48x256xbf16, #tpu.memory_space<vmem>>, vector<4x256xbf16>
    tpu.vector_store %arg7[%c4, %c0_23], %14 {strides = array<i32>} : memref<48x256xbf16, #tpu.memory_space<vmem>>, vector<4x256xbf16>,
    %c0_24 = arith.constant 0 : index
    %c0_25 = arith.constant 0 : index
    %c0_26 = arith.constant 0 : index
    %c2 = arith.constant 2 : index
    %16 = vector.load %arg6[%c0_24, %c0_25, %c0_26, %c2] : memref<1x4x18x18xf32, #tpu.memory_space<vmem>>, vector<1x4x16x16xf32>
    %17 = vector.shape_cast %16 : vector<1x4x16x16xf32> to vector<4x16x16xf32>
    %18 = vector.shape_cast %17 : vector<4x16x16xf32> to vector<4x256xf32>
    %19 = arith.truncf %18 : vector<4x256xf32> to vector<4x256xbf16>
    %c8 = arith.constant 8 : index
    %c0_27 = arith.constant 0 : index
    %20 = vector.load %arg7[%c8, %c0_27] : memref<48x256xbf16, #tpu.memory_space<vmem>>, vector<4x256xbf16>
    tpu.vector_store %arg7[%c8, %c0_27], %19 {strides = array<i32>} : memref<48x256xbf16, #tpu.memory_space<vmem>>, vector<4x256xbf16>,
    %c0_28 = arith.constant 0 : index
    %c0_29 = arith.constant 0 : index
    %c1_30 = arith.constant 1 : index
    %c0_31 = arith.constant 0 : index
    %21 = vector.load %arg6[%c0_28, %c0_29, %c1_30, %c0_31] : memref<1x4x18x18xf32, #tpu.memory_space<vmem>>, vector<1x4x16x16xf32>
    %22 = vector.shape_cast %21 : vector<1x4x16x16xf32> to vector<4x16x16xf32>
    %23 = vector.shape_cast %22 : vector<4x16x16xf32> to vector<4x256xf32>
    %24 = arith.truncf %23 : vector<4x256xf32> to vector<4x256xbf16>
    %c12 = arith.constant 12 : index
    %c0_32 = arith.constant 0 : index
    %25 = vector.load %arg7[%c12, %c0_32] : memref<48x256xbf16, #tpu.memory_space<vmem>>, vector<4x256xbf16>
    tpu.vector_store %arg7[%c12, %c0_32], %24 {strides = array<i32>} : memref<48x256xbf16, #tpu.memory_space<vmem>>, vector<4x256xbf16>,
    %c0_33 = arith.constant 0 : index
    %c0_34 = arith.constant 0 : index
    %c1_35 = arith.constant 1 : index
    %c1_36 = arith.constant 1 : index
    %26 = vector.load %arg6[%c0_33, %c0_34, %c1_35, %c1_36] : memref<1x4x18x18xf32, #tpu.memory_space<vmem>>, vector<1x4x16x16xf32>
    %27 = vector.shape_cast %26 : vector<1x4x16x16xf32> to vector<4x16x16xf32>
    %28 = vector.shape_cast %27 : vector<4x16x16xf32> to vector<4x256xf32>
    %29 = arith.truncf %28 : vector<4x256xf32> to vector<4x256xbf16>
    %c16 = arith.constant 16 : index
    %c0_37 = arith.constant 0 : index
    %30 = vector.load %arg7[%c16, %c0_37] : memref<48x256xbf16, #tpu.memory_space<vmem>>, vector<4x256xbf16>
    tpu.vector_store %arg7[%c16, %c0_37], %29 {strides = array<i32>} : memref<48x256xbf16, #tpu.memory_space<vmem>>, vector<4x256xbf16>,
    %c0_38 = arith.constant 0 : index
    %c0_39 = arith.constant 0 : index
    %c1_40 = arith.constant 1 : index
    %c2_41 = arith.constant 2 : index
    %31 = vector.load %arg6[%c0_38, %c0_39, %c1_40, %c2_41] : memref<1x4x18x18xf32, #tpu.memory_space<vmem>>, vector<1x4x16x16xf32>
    %32 = vector.shape_cast %31 : vector<1x4x16x16xf32> to vector<4x16x16xf32>
    %33 = vector.shape_cast %32 : vector<4x16x16xf32> to vector<4x256xf32>
    %34 = arith.truncf %33 : vector<4x256xf32> to vector<4x256xbf16>
    %c20 = arith.constant 20 : index
    %c0_42 = arith.constant 0 : index
    %35 = vector.load %arg7[%c20, %c0_42] : memref<48x256xbf16, #tpu.memory_space<vmem>>, vector<4x256xbf16>
    tpu.vector_store %arg7[%c20, %c0_42], %34 {strides = array<i32>} : memref<48x256xbf16, #tpu.memory_space<vmem>>, vector<4x256xbf16>,
    %c0_43 = arith.constant 0 : index
    %c0_44 = arith.constant 0 : index
    %c2_45 = arith.constant 2 : index
    %c0_46 = arith.constant 0 : index
    %36 = vector.load %arg6[%c0_43, %c0_44, %c2_45, %c0_46] : memref<1x4x18x18xf32, #tpu.memory_space<vmem>>, vector<1x4x16x16xf32>
    %37 = vector.shape_cast %36 : vector<1x4x16x16xf32> to vector<4x16x16xf32>
    %38 = vector.shape_cast %37 : vector<4x16x16xf32> to vector<4x256xf32>
    %39 = arith.truncf %38 : vector<4x256xf32> to vector<4x256xbf16>
    %c24 = arith.constant 24 : index
    %c0_47 = arith.constant 0 : index
    %40 = vector.load %arg7[%c24, %c0_47] : memref<48x256xbf16, #tpu.memory_space<vmem>>, vector<4x256xbf16>
    tpu.vector_store %arg7[%c24, %c0_47], %39 {strides = array<i32>} : memref<48x256xbf16, #tpu.memory_space<vmem>>, vector<4x256xbf16>,
    %c0_48 = arith.constant 0 : index
    %c0_49 = arith.constant 0 : index
    %c2_50 = arith.constant 2 : index
    %c1_51 = arith.constant 1 : index
    %41 = vector.load %arg6[%c0_48, %c0_49, %c2_50, %c1_51] : memref<1x4x18x18xf32, #tpu.memory_space<vmem>>, vector<1x4x16x16xf32>
    %42 = vector.shape_cast %41 : vector<1x4x16x16xf32> to vector<4x16x16xf32>
    %43 = vector.shape_cast %42 : vector<4x16x16xf32> to vector<4x256xf32>
    %44 = arith.truncf %43 : vector<4x256xf32> to vector<4x256xbf16>
    %c28 = arith.constant 28 : index
    %c0_52 = arith.constant 0 : index
    %45 = vector.load %arg7[%c28, %c0_52] : memref<48x256xbf16, #tpu.memory_space<vmem>>, vector<4x256xbf16>
    tpu.vector_store %arg7[%c28, %c0_52], %44 {strides = array<i32>} : memref<48x256xbf16, #tpu.memory_space<vmem>>, vector<4x256xbf16>,
    %c0_53 = arith.constant 0 : index
    %c0_54 = arith.constant 0 : index
    %c2_55 = arith.constant 2 : index
    %c2_56 = arith.constant 2 : index
    %46 = vector.load %arg6[%c0_53, %c0_54, %c2_55, %c2_56] : memref<1x4x18x18xf32, #tpu.memory_space<vmem>>, vector<1x4x16x16xf32>
    %47 = vector.shape_cast %46 : vector<1x4x16x16xf32> to vector<4x16x16xf32>
    %48 = vector.shape_cast %47 : vector<4x16x16xf32> to vector<4x256xf32>
    %49 = arith.truncf %48 : vector<4x256xf32> to vector<4x256xbf16>
    %c32 = arith.constant 32 : index
    %c0_57 = arith.constant 0 : index
    %50 = vector.load %arg7[%c32, %c0_57] : memref<48x256xbf16, #tpu.memory_space<vmem>>, vector<4x256xbf16>
    tpu.vector_store %arg7[%c32, %c0_57], %49 {strides = array<i32>} : memref<48x256xbf16, #tpu.memory_space<vmem>>, vector<4x256xbf16>,
    %c0_58 = arith.constant 0 : index
    %c0_59 = arith.constant 0 : index
    %51 = vector.load %arg3[%c0_58, %c0_59] : memref<32x3xf32, #tpu.memory_space<vmem>>, vector<32x1xf32>
    %c0_60 = arith.constant 0 : index
    %c1_61 = arith.constant 1 : index
    %52 = vector.load %arg3[%c0_60, %c1_61] : memref<32x3xf32, #tpu.memory_space<vmem>>, vector<32x1xf32>
    %c0_62 = arith.constant 0 : index
    %c2_63 = arith.constant 2 : index
    %53 = vector.load %arg3[%c0_62, %c2_63] : memref<32x3xf32, #tpu.memory_space<vmem>>, vector<32x1xf32>
    %c0_64 = arith.constant 0 : index
    %c0_65 = arith.constant 0 : index
    %54 = vector.load %arg2[%c0_64, %c0_65] : memref<32x48xbf16, #tpu.memory_space<vmem>>, vector<32x48xbf16>
    %c0_66 = arith.constant 0 : index
    %c0_67 = arith.constant 0 : index
    %55 = vector.load %arg7[%c0_66, %c0_67] : memref<48x256xbf16, #tpu.memory_space<vmem>>, vector<48x256xbf16>
    %cst_68 = arith.constant dense<0.000000e+00> : vector<32x256xf32>
    %56 = tpu.matmul %54, %55, %cst_68 {dimension_numbers = #tpu.dot_dimension_numbers<[1], [0], [0], [1], [0, 0, 1, 1], [], []>} : vector<32x48xbf16>, vector<48x256xbf16>, vector<32x256xf32> -> vector<32x256xf32>
    %57 = vector.broadcast %51 : vector<32x1xf32> to vector<32x256xf32>
    %58 = arith.addf %56, %57 : vector<32x256xf32>
    %cst_69 = arith.constant dense<0.000000e+00> : vector<32xf32>
    %59 = vector.multi_reduction <add>, %58, %cst_69 [1] : vector<32x256xf32> to vector<32xf32>
    %60 = vector.shape_cast %59 : vector<32xf32> to vector<32x1xf32>
    %61 = arith.mulf %58, %58 : vector<32x256xf32>
    %cst_70 = arith.constant dense<0.000000e+00> : vector<32xf32>
    %62 = vector.multi_reduction <add>, %61, %cst_70 [1] : vector<32x256xf32> to vector<32xf32>
    %63 = vector.shape_cast %62 : vector<32xf32> to vector<32x1xf32>
    %64 = tpu.concatenate %60, %63 in 1 : vector<32x1xf32>, vector<32x1xf32> -> vector<32x2xf32>
    %c0_71 = arith.constant 0 : index
    %c0_72 = arith.constant 0 : index
    %65 = vector.load %arg4[%c0_71, %c0_72] : memref<32x32xf32, #tpu.memory_space<vmem>>, vector<32x32xf32>
    %cst_73 = arith.constant dense<0.000000e+00> : vector<32x2xf32>
    %66 = tpu.matmul %65, %64, %cst_73 {dimension_numbers = #tpu.dot_dimension_numbers<[1], [0], [0], [1], [0, 0, 1, 1], [], []>} : vector<32x32xf32>, vector<32x2xf32>, vector<32x2xf32> -> vector<32x2xf32>
    %67 = vector.extract_strided_slice %66 {offsets = [0, 0], sizes = [32, 1], strides = [1, 1]} : vector<32x2xf32> to vector<32x1xf32>
    %68 = vector.extract_strided_slice %66 {offsets = [0, 1], sizes = [32, 1], strides = [1, 1]} : vector<32x2xf32> to vector<32x1xf32>
    %69 = arith.mulf %67, %67 : vector<32x1xf32>
    %70 = arith.subf %68, %69 : vector<32x1xf32>
    %cst_74 = arith.constant 0.000000e+00 : f32
    %71 = vector.broadcast %cst_74 : f32 to vector<32x1xf32>
    %72 = arith.maximumf %70, %71 : vector<32x1xf32>
    %cst_75 = arith.constant 9.99999974E-6 : f32
    %73 = vector.broadcast %cst_75 : f32 to vector<32x1xf32>
    %74 = arith.addf %72, %73 : vector<32x1xf32>
    %75 = math.rsqrt %74 : vector<32x1xf32>
    %76 = arith.mulf %75, %52 : vector<32x1xf32>
    %77 = arith.mulf %67, %76 : vector<32x1xf32>
    %78 = arith.subf %53, %77 : vector<32x1xf32>
    %79 = vector.broadcast %76 : vector<32x1xf32> to vector<32x256xf32>
    %80 = arith.mulf %58, %79 : vector<32x256xf32>
    %81 = vector.broadcast %78 : vector<32x1xf32> to vector<32x256xf32>
    %82 = arith.addf %80, %81 : vector<32x256xf32>
    %cst_76 = arith.constant 0.000000e+00 : f32
    %83 = vector.broadcast %cst_76 : f32 to vector<32x256xf32>
    %84 = arith.maximumf %82, %83 : vector<32x256xf32>
    %c0_77 = arith.constant 0 : index
    %c0_78 = arith.constant 0 : index
    %c0_79 = arith.constant 0 : index
    %85 = vector.load %arg5[%c0_77, %c0_78, %c0_79] : memref<1x32x256xf32, #tpu.memory_space<vmem>>, vector<1x32x256xf32>
    %86 = vector.shape_cast %85 : vector<1x32x256xf32> to vector<32x256xf32>
    %87 = vector.shape_cast %84 : vector<32x256xf32> to vector<1x32x256xf32>
    tpu.vector_store %arg5[%c0_77, %c0_78, %c0_79], %87 {strides = array<i32>} : memref<1x32x256xf32, #tpu.memory_space<vmem>>, vector<1x32x256xf32>,
    return
  }
  func.func @transform_0(%arg0: i32) -> (i32, i32, i32, i32) {
    %c0_i32 = arith.constant 0 : i32
    %c0_i32_0 = arith.constant 0 : i32
    %c0_i32_1 = arith.constant 0 : i32
    %c0_i32_2 = arith.constant 0 : i32
    return %arg0, %c0_i32, %c0_i32_0, %c0_i32_1 : i32, i32, i32, i32
  }
  func.func @transform_1(%arg0: i32) -> (i32, i32) {
    %c0_i32 = arith.constant 0 : i32
    %c0_i32_0 = arith.constant 0 : i32
    %c0_i32_1 = arith.constant 0 : i32
    return %c0_i32, %c0_i32_0 : i32, i32
  }
  func.func @transform_2(%arg0: i32) -> (i32, i32) {
    %c0_i32 = arith.constant 0 : i32
    %c0_i32_0 = arith.constant 0 : i32
    %c0_i32_1 = arith.constant 0 : i32
    return %c0_i32, %c0_i32_0 : i32, i32
  }
  func.func @transform_3(%arg0: i32) -> (i32, i32) {
    %c0_i32 = arith.constant 0 : i32
    %c0_i32_0 = arith.constant 0 : i32
    %c0_i32_1 = arith.constant 0 : i32
    return %c0_i32, %c0_i32_0 : i32, i32
  }
  func.func @transform_4(%arg0: i32) -> (i32, i32, i32) {
    %c0_i32 = arith.constant 0 : i32
    %c0_i32_0 = arith.constant 0 : i32
    %c0_i32_1 = arith.constant 0 : i32
    return %arg0, %c0_i32, %c0_i32_0 : i32, i32, i32
  }
}

</mosaic_0001>

<llo_original>
// kernel: tpu_custom_call.1
$region0: #{tpu_custom_call.1}
  #allocation0 [shape = 'u32[]', space=smem, size = 0x4, offset = 0x4, fixed_abs, tag = 'smem constant byte address 0x4 - core index']
  #allocation1 [shape = 'u32[144,128]{1,0:T(1,128)}', space=vmem, size = 0x12000, scoped, tag = 'internal scratch']
  #allocation2 [shape = 'f32[1,4,18,18]{3,2,1,0:T(8,128)}', space=vmem, size = 0xc000, scoped, tag = 'scratch operand']
  #allocation3 [shape = 'bf16[48,256]{1,0:T(8,128)(2,1)}', space=vmem, size = 0x6000, scoped, tag = 'scratch operand']
  %s0 = inlined_call_operand.hbm [shape: f32[2,4,16,16], index: 0, kind: input, shape index: {}]
  %s1 = inlined_call_operand.hbm [shape: bf16[32,48], index: 1, kind: input, shape index: {}]
  %s2 = inlined_call_operand.vmem [shape: f32[32,3], index: 2, kind: input, shape index: {}]
  %s3 = inlined_call_operand.vmem [shape: f32[32,32], index: 3, kind: input, shape index: {}]
  %s4 = inlined_call_operand.hbm [shape: f32[2,32,256], index: 4, kind: output, shape index: {}]
  %s5 = sld [smem:[#allocation0]]
  $region57: #{tpu_custom_call.1} parent=0
    _
  %s7 = ssub.s32 1, %s5
  %s8 = scalar_select 0, %s7, %s5
  $region1: #{tpu_custom_call.1} parent=0
    #allocation4 [shape = 'u8[65536]{0}', space=vmem, size = 0x10000, scoped, tag = 'input window, operand 0']
    #allocation5 [shape = 's32[2]{0}', space=sflag, size = 0x8, scoped, tag = 'scoped memory for tpu_custom_call.1']
    #allocation6 [shape = 's32[2]{0}', space=sflag, size = 0x8, scoped, tag = 'scoped memory for tpu_custom_call.1']
    #allocation7 [shape = 'u8[8192]{0}', space=vmem, size = 0x2000, scoped, tag = 'input window, operand 1, single buffered']
    #allocation8 [shape = 's32[1]{0}', space=sflag, size = 0x4, scoped, tag = 'scoped memory for tpu_custom_call.1']
    #allocation9 [shape = 'u8[65536]{0}', space=vmem, size = 0x10000, scoped, tag = 'output window, operand 0']
    %9 = vsyncpa [#allocation5], 0
    %s10 = scalar_lea.sflag [#allocation5], 1
    %11 = vsyncpa %s10, 0
    %12 = vsyncpa [#allocation8], 0
    %13 = vsyncpa [#allocation6], 0
    %s14 = scalar_lea.sflag [#allocation6], 1
    %15 = vsyncpa %s14, 0
    loop: start=0, step=1, limit=4
    $region2: #{tpu_custom_call.1} parent=1 // loop_pre_header
      _
    $region3: #{tpu_custom_call.1} parent=1 // loop_header
      %s17 = sphi 0, %s21
      %p18 = scmp.ge.s32.totalorder %s17, 4
      %s27 = sphi 0, %s29
      %s30 = sphi 0, %s27
      %s31 = sphi 0, %s30
      %s47 = sphi 0, %s31
      %s51 = sphi 0, %s51
      %s53 = sphi 0, %s51
      %s54 = sphi 0, %s53
      %s68 = sphi 0, %s54
      %s72 = sphi 0, %s72
      %s74 = sphi 0, %s72
      %s75 = sphi 0, %s74
      %s89 = sphi 0, %s75
      %s93 = sphi 0, %s93
      %s95 = sphi 0, %s93
      %s96 = sphi 0, %s95
      %s110 = sphi 0, %s96
      %s116 = sphi 0, %s118
      %s119 = sphi 0, %s116
      %s120 = sphi 0, %s119
      %s136 = sphi 0, %s120
    $region4: #{tpu_custom_call.1} parent=1 // loop_header_branch
      %20 = sbr.rel (%p18) target = $region8
    $region5: #{tpu_custom_call.1} parent=1 // loop_body
      %s22 = ssub.s32 %s17, 1
      %s23 = ssub.s32 %s17, 2
      %s24 = sadd.s32 %s17, 1
      %s25 = ssub.s32 %s17, %s24
      %p26 = scmp.eq.s32.totalorder %s25, 0
      %s28 = sadd.s32 %s27, 1
      %s29 = scalar_select %p26, %s27, %s28
      %p32 = pneg %p26
      %p33 = scmp.eq.s32.totalorder %s17, 1
      %p34 = por %p32, %p33
      %p35 = scmp.ne.s32.totalorder %s27, %s30
      %p36 = scmp.eq.s32.totalorder %s17, 0
      %p37 = por %p35, %p36
      %p38 = scmp.ne.s32.totalorder %s27, %s30
      %p39 = scmp.eq.s32.totalorder %s22, 1
      %p40 = por %p38, %p39
      %p41 = scmp.ne.s32.totalorder %s30, %s31
      %p42 = scmp.eq.s32.totalorder %s22, 0
      %p43 = por %p41, %p42
      %p44 = scmp.ne.s32.totalorder %s30, %s31
      %p45 = scmp.eq.s32.totalorder %s23, 1
      %p46 = por %p44, %p45
      %p48 = scmp.ne.s32.totalorder %s31, %s47
      %p49 = scmp.eq.s32.totalorder %s23, 0
      %p50 = por %p48, %p49
      %s52 = sadd.s32 %s51, 1
      %p55 = scmp.eq.s32.totalorder %s17, 1
      %p56 = scmp.ne.s32.totalorder %s51, %s53
      %p57 = scmp.eq.s32.totalorder %s17, 0
      %p58 = por %p56, %p57
      %p59 = scmp.ne.s32.totalorder %s51, %s53
      %p60 = scmp.eq.s32.totalorder %s22, 1
      %p61 = por %p59, %p60
      %p62 = scmp.ne.s32.totalorder %s53, %s54
      %p63 = scmp.eq.s32.totalorder %s22, 0
      %p64 = por %p62, %p63
      %p65 = scmp.ne.s32.totalorder %s53, %s54
      %p66 = scmp.eq.s32.totalorder %s23, 1
      %p67 = por %p65, %p66
      %p69 = scmp.ne.s32.totalorder %s54, %s68
      %p70 = scmp.eq.s32.totalorder %s23, 0
      %p71 = por %p69, %p70
      %s73 = sadd.s32 %s72, 1
      %p76 = scmp.eq.s32.totalorder %s17, 1
      %p77 = scmp.ne.s32.totalorder %s72, %s74
      %p78 = scmp.eq.s32.totalorder %s17, 0
      %p79 = por %p77, %p78
      %p80 = scmp.ne.s32.totalorder %s72, %s74
      %p81 = scmp.eq.s32.totalorder %s22, 1
      %p82 = por %p80, %p81
      %p83 = scmp.ne.s32.totalorder %s74, %s75
      %p84 = scmp.eq.s32.totalorder %s22, 0
      %p85 = por %p83, %p84
      %p86 = scmp.ne.s32.totalorder %s74, %s75
      %p87 = scmp.eq.s32.totalorder %s23, 1
      %p88 = por %p86, %p87
      %p90 = scmp.ne.s32.totalorder %s75, %s89
      %p91 = scmp.eq.s32.totalorder %s23, 0
      %p92 = por %p90, %p91
      %s94 = sadd.s32 %s93, 1
      %p97 = scmp.eq.s32.totalorder %s17, 1
      %p98 = scmp.ne.s32.totalorder %s93, %s95
      %p99 = scmp.eq.s32.totalorder %s17, 0
      %p100 = por %p98, %p99
      %p101 = scmp.ne.s32.totalorder %s93, %s95
      %p102 = scmp.eq.s32.totalorder %s22, 1
      %p103 = por %p101, %p102
      %p104 = scmp.ne.s32.totalorder %s95, %s96
      %p105 = scmp.eq.s32.totalorder %s22, 0
      %p106 = por %p104, %p105
      %p107 = scmp.ne.s32.totalorder %s95, %s96
      %p108 = scmp.eq.s32.totalorder %s23, 1
      %p109 = por %p107, %p108
      %p111 = scmp.ne.s32.totalorder %s96, %s110
      %p112 = scmp.eq.s32.totalorder %s23, 0
      %p113 = por %p111, %p112
      %s114 = ssub.s32 %s17, %s24
      %p115 = scmp.eq.s32.totalorder %s114, 0
      %s117 = sadd.s32 %s116, 1
      %s118 = scalar_select %p115, %s116, %s117
      %p121 = pneg %p115
      %p122 = scmp.eq.s32.totalorder %s17, 1
      %p123 = por %p121, %p122
      %p124 = scmp.ne.s32.totalorder %s116, %s119
      %p125 = scmp.eq.s32.totalorder %s17, 0
      %p126 = por %p124, %p125
      %p127 = scmp.ne.s32.totalorder %s116, %s119
      %p128 = scmp.eq.s32.totalorder %s22, 1
      %p129 = por %p127, %p128
      %p130 = scmp.ne.s32.totalorder %s119, %s120
      %p131 = scmp.eq.s32.totalorder %s22, 0
      %p132 = por %p130, %p131
      %p133 = scmp.ne.s32.totalorder %s119, %s120
      %p134 = scmp.eq.s32.totalorder %s23, 1
      %p135 = por %p133, %p134
      %p137 = scmp.ne.s32.totalorder %s120, %s136
      %p138 = scmp.eq.s32.totalorder %s23, 0
      %p139 = por %p137, %p138
      %p140 = scmp.le.s32.totalorder 1, %s17
      %p141 = scmp.lt.s32.totalorder %s17, 3
      %p142 = pnand %p140, %p141
      %p143 = pneg %p142
      // Predicated region
      $region9: #{tpu_custom_call.1} parent=5 // pred_check
        _
      $region10: #{tpu_custom_call.1} parent=5 // pred_check_branch
        %145 = sbr.rel (%p142) target = $region12
      $region11: #{tpu_custom_call.1} parent=5 // pred_region
        %s146 = ssub.s32 %s17, 1
        // Predicated region
        $region13: #{tpu_custom_call.1} parent=11 // pred_check
          %p147 = pneg %p64
        $region14: #{tpu_custom_call.1} parent=11 // pred_check_branch
          %149 = sbr.rel (%p147) target = $region16
        $region15: #{tpu_custom_call.1} parent=11 // pred_region
          %s151 = ssub.s32 256, 256
          %152 = vsyncadd [#allocation8], %s151
          %s153 = sshll.u32 [#allocation7], 4
          %s154 = int_to_ptr.vmem [resolvable:$true] %s153
          %159 = dma.hbm_to_vmem [thread:$0]  %s1, 256, %s154, [#allocation8], 64, 64, 4
        $region16: #{tpu_custom_call.1} parent=11 // pred_fallthru
          _
        // Predicated region
        $region17: #{tpu_custom_call.1} parent=11 // pred_check
          %p160 = pneg %p85
        $region18: #{tpu_custom_call.1} parent=11 // pred_check_branch
          %162 = sbr.rel (%p160) target = $region20
        $region19: #{tpu_custom_call.1} parent=11 // pred_region
          _
        $region20: #{tpu_custom_call.1} parent=11 // pred_fallthru
          _
        // Predicated region
        $region21: #{tpu_custom_call.1} parent=11 // pred_check
          %p163 = pneg %p106
        $region22: #{tpu_custom_call.1} parent=11 // pred_check_branch
          %165 = sbr.rel (%p163) target = $region24
        $region23: #{tpu_custom_call.1} parent=11 // pred_region
          _
        $region24: #{tpu_custom_call.1} parent=11 // pred_fallthru
          _
      $region12: #{tpu_custom_call.1} parent=5 // pred_fallthru
        _
      %p166 = scmp.lt.s32.totalorder %s17, 2
      // Predicated region
      $region25: #{tpu_custom_call.1} parent=5 // pred_check
        %p167 = pneg %p166
      $region26: #{tpu_custom_call.1} parent=5 // pred_check_branch
        %169 = sbr.rel (%p167) target = $region28
      $region27: #{tpu_custom_call.1} parent=5 // pred_region
        // Predicated region
        $region29: #{tpu_custom_call.1} parent=27 // pred_check
          %p170 = pneg %p37
        $region30: #{tpu_custom_call.1} parent=27 // pred_check_branch
          %172 = sbr.rel (%p170) target = $region32
        $region31: #{tpu_custom_call.1} parent=27 // pred_region
          %s173 = sand.u32 %s27, 1
          %s174 = scalar_lea.sflag [#allocation5], %s173
          %s175 = sand.u32 %s27, 1
          %s176 = smul.addr %s175, 64
          %s177 = scalar_lea.vmem [#allocation4], %s176
          %s179 = ssub.s32 1024, 1024
          %180 = vsyncadd %s174, %s179
          %s181 = smul.addr %s17, 8
          %s182 = smul.addr %s181, 128
          %s183 = scalar_lea.hbm %s0, %s182
          %s184 = sshll.u32 %s177, 4
          %s185 = int_to_ptr.vmem [resolvable:$true] %s184
          %190 = dma.hbm_to_vmem [thread:$0]  %s183, 1024, %s185, %s174, 128, 128, 8
        $region32: #{tpu_custom_call.1} parent=27 // pred_fallthru
          _
      $region28: #{tpu_custom_call.1} parent=5 // pred_fallthru
        _
      %p191 = scmp.le.s32.totalorder 1, %s17
      %p192 = scmp.lt.s32.totalorder %s17, 3
      %p193 = pnand %p191, %p192
      %p194 = pneg %p193
      // Predicated region
      $region33: #{tpu_custom_call.1} parent=5 // pred_check
        _
      $region34: #{tpu_custom_call.1} parent=5 // pred_check_branch
        %196 = sbr.rel (%p193) target = $region36
      $region35: #{tpu_custom_call.1} parent=5 // pred_region
        %s197 = ssub.s32 %s17, 1
        %s198 = sand.u32 %s30, 1
        %s199 = scalar_lea.sflag [#allocation5], %s198
        %s200 = sand.u32 %s30, 1
        %s201 = smul.addr %s200, 64
        %s202 = scalar_lea.vmem [#allocation4], %s201
        // Predicated region
        $region37: #{tpu_custom_call.1} parent=35 // pred_check
          %p203 = pneg %p43
        $region38: #{tpu_custom_call.1} parent=35 // pred_check_branch
          %205 = sbr.rel (%p203) target = $region40
        $region39: #{tpu_custom_call.1} parent=35 // pred_region
          %206 = dma.done %s199, 1024
        $region40: #{tpu_custom_call.1} parent=35 // pred_fallthru
          _
        // Predicated region
        $region41: #{tpu_custom_call.1} parent=35 // pred_check
          %p207 = pneg %p64
        $region42: #{tpu_custom_call.1} parent=35 // pred_check_branch
          %209 = sbr.rel (%p207) target = $region44
        $region43: #{tpu_custom_call.1} parent=35 // pred_region
          %210 = dma.done [#allocation8], 256
        $region44: #{tpu_custom_call.1} parent=35 // pred_fallthru
          _
        %s211 = sand.u32 %s30, 1
        %s212 = scalar_lea.sflag [#allocation5], %s211
        %s213 = sand.u32 %s30, 1
        %s214 = smul.addr %s213, 64
        %s215 = scalar_lea.vmem [#allocation4], %s214
        %p216 = pneg %p43
        %p217 = pneg %p40
        %p218 = pneg %p64
        %p219 = pneg %p61
        %p220 = pneg %p85
        %p221 = pneg %p82
        %p222 = pneg %p106
        %p223 = pneg %p103
        %p224 = pneg %p132
        %p225 = pneg %p129
        %s226 = sand.u32 %s119, 1
        %s227 = scalar_lea.sflag [#allocation6], %s226
        %s228 = sand.u32 %s119, 1
        %s229 = smul.addr %s228, 64
        %s230 = scalar_lea.vmem [#allocation9], %s229
        %vm232 = vcmask 146432
        %233 = vst.msk [vmem:[#allocation2] sm:$0xff] %vm232, 0.0
        %234 = vst.msk [vmem:[#allocation2 + $0x8] sm:$0xff] %vm232, 0.0
        %vm235 = vcmask 140288
        %236 = vst.msk [vmem:[#allocation2 + $0x10] sm:$0x3] %vm235, 0.0
        %237 = vst.msk [vmem:[#allocation2 + $0x18] sm:$0xff] %vm232, 0.0
        %238 = vst.msk [vmem:[#allocation2 + $0x20] sm:$0xff] %vm232, 0.0
        %239 = vst.msk [vmem:[#allocation2 + $0x28] sm:$0x3] %vm235, 0.0
        %240 = vst.msk [vmem:[#allocation2 + $0x30] sm:$0xff] %vm232, 0.0
        %241 = vst.msk [vmem:[#allocation2 + $0x38] sm:$0xff] %vm232, 0.0
        %242 = vst.msk [vmem:[#allocation2 + $0x40] sm:$0x3] %vm235, 0.0
        %243 = vst.msk [vmem:[#allocation2 + $0x48] sm:$0xff] %vm232, 0.0
        %244 = vst.msk [vmem:[#allocation2 + $0x50] sm:$0xff] %vm232, 0.0
        %245 = vst.msk [vmem:[#allocation2 + $0x58] sm:$0x3] %vm235, 0.0
        %v246 = vld [vmem:[%s202] sm:$0xff]
        %v247 = vld [vmem:[%s202 + $0x8] sm:$0xff]
        %v248 = vld [vmem:[%s202 + $0x10] sm:$0xff]
        %v249 = vld [vmem:[%s202 + $0x18] sm:$0xff]
        %v250 = vld [vmem:[%s202 + $0x20] sm:$0xff]
        %v251 = vld [vmem:[%s202 + $0x28] sm:$0xff]
        %v252 = vld [vmem:[%s202 + $0x30] sm:$0xff]
        %v253 = vld [vmem:[%s202 + $0x38] sm:$0xff]
        %262 = vrot.lane.b32.xlu0 %v246, 1
        %v263 = vpop.permute.xlu0 %262
        %264 = vrot.lane.b32.xlu0 %v247, 1
        %v265 = vpop.permute.xlu0 %264
        %266 = vrot.lane.b32.xlu0 %v248, 1
        %v267 = vpop.permute.xlu0 %266
        %268 = vrot.lane.b32.xlu0 %v249, 1
        %v269 = vpop.permute.xlu0 %268
        %270 = vrot.lane.b32.xlu0 %v250, 1
        %v271 = vpop.permute.xlu0 %270
        %272 = vrot.lane.b32.xlu0 %v251, 1
        %v273 = vpop.permute.xlu0 %272
        %274 = vrot.lane.b32.xlu0 %v252, 1
        %v275 = vpop.permute.xlu0 %274
        %276 = vrot.lane.b32.xlu0 %v253, 1
        %v277 = vpop.permute.xlu0 %276
        %vm286 = vcmask 138248
        %287 = vst.msk [vmem:[#allocation2 + $0x1] sm:$0xff] %vm286, %v263
        %288 = vst.msk [vmem:[#allocation2 + $0x9] sm:$0xff] %vm286, %v265
        %289 = vst.msk [vmem:[#allocation2 + $0x19] sm:$0xff] %vm286, %v267
        %290 = vst.msk [vmem:[#allocation2 + $0x21] sm:$0xff] %vm286, %v269
        %291 = vst.msk [vmem:[#allocation2 + $0x31] sm:$0xff] %vm286, %v271
        %292 = vst.msk [vmem:[#allocation2 + $0x39] sm:$0xff] %vm286, %v273
        %293 = vst.msk [vmem:[#allocation2 + $0x49] sm:$0xff] %vm286, %v275
        %294 = vst.msk [vmem:[#allocation2 + $0x51] sm:$0xff] %vm286, %v277
        %295 = vst [vmem:[#allocation3] sm:$0xff] 0
        %296 = vst [vmem:[#allocation3 + $0x8] sm:$0xff] 0
        %297 = vst [vmem:[#allocation3 + $0x10] sm:$0xff] 0
        %298 = vst [vmem:[#allocation3 + $0x18] sm:$0xff] 0
        %299 = vst [vmem:[#allocation3 + $0x20] sm:$0xff] 0
        %300 = vst [vmem:[#allocation3 + $0x28] sm:$0xff] 0
        %v301 = vld [vmem:[#allocation2] sm:$0xff]
        %v302 = vld [vmem:[#allocation2 + $0x8] sm:$0xff]
        %v303 = vld [vmem:[#allocation2 + $0x18] sm:$0xff]
        %v304 = vld [vmem:[#allocation2 + $0x20] sm:$0xff]
        %v305 = vld [vmem:[#allocation2 + $0x30] sm:$0xff]
        %v306 = vld [vmem:[#allocation2 + $0x38] sm:$0xff]
        %v307 = vld [vmem:[#allocation2 + $0x48] sm:$0xff]
        %v308 = vld [vmem:[#allocation2 + $0x50] sm:$0xff]
        %v309 = vcombine.low %v301, %v305
        %v310 = vcombine.high %v301, %v305
        %v312 = vunpack.c.l.s4 1983009808
        %v313 = vunpack.c.0.s8 %v312
        %v314 = vlaneseq
        %v315 = vshrl.u32 %v314, 7
        %v316 = vsub.s32 %v313, %v315
        %v317 = vrot.slane %v309, %v316
        %v319 = vunpack.c.l.s4 1983009808
        %v320 = vunpack.c.0.s8 %v319
        %v321 = vlaneseq
        %v322 = vshrl.u32 %v321, 7
        %v323 = vsub.s32 %v320, %v322
        %v324 = vrot.slane %v310, %v323
        %v325 = vcombine.low %v303, %v307
        %v326 = vcombine.high %v303, %v307
        %v328 = vunpack.c.l.s4 1983009808
        %v329 = vunpack.c.0.s8 %v328
        %v330 = vlaneseq
        %v331 = vshrl.u32 %v330, 7
        %v332 = vsub.s32 %v329, %v331
        %v333 = vrot.slane %v325, %v332
        %v335 = vunpack.c.l.s4 1983009808
        %v336 = vunpack.c.0.s8 %v335
        %v337 = vlaneseq
        %v338 = vshrl.u32 %v337, 7
        %v339 = vsub.s32 %v336, %v338
        %v340 = vrot.slane %v326, %v339
        %v341 = vcombine.low %v317, %v333
        %v342 = vcombine.high %v317, %v333
        %v344 = vunpack.c.l.s4 1934713408
        %v345 = vunpack.c.0.s8 %v344
        %v346 = vlaneseq
        %v347 = vshrl.u32 %v346, 7
        %v348 = vsub.s32 %v345, %v347
        %v349 = vrot.slane %v341, %v348
        %v351 = vunpack.c.l.s4 1934713408
        %v352 = vunpack.c.0.s8 %v351
        %v353 = vlaneseq
        %v354 = vshrl.u32 %v353, 7
        %v355 = vsub.s32 %v352, %v354
        %v356 = vrot.slane %v342, %v355
        %v357 = vcombine.low %v324, %v340
        %v358 = vcombine.high %v324, %v340
        %v360 = vunpack.c.l.s4 1934713408
        %v361 = vunpack.c.0.s8 %v360
        %v362 = vlaneseq
        %v363 = vshrl.u32 %v362, 7
        %v364 = vsub.s32 %v361, %v363
        %v365 = vrot.slane %v357, %v364
        %v367 = vunpack.c.l.s4 1934713408
        %v368 = vunpack.c.0.s8 %v367
        %v369 = vlaneseq
        %v370 = vshrl.u32 %v369, 7
        %v371 = vsub.s32 %v368, %v370
        %v372 = vrot.slane %v358, %v371
        %v373 = vcombine.high %v349, 0.0
        %v374 = vcombine.high %v356, 0.0
        %v375 = vcombine.high %v365, 0.0
        %v376 = vcombine.high %v372, 0.0
        %v377 = vcombine.low %v302, %v306
        %v378 = vcombine.high %v302, %v306
        %v380 = vunpack.c.l.s4 1983009808
        %v381 = vunpack.c.0.s8 %v380
        %v382 = vlaneseq
        %v383 = vshrl.u32 %v382, 7
        %v384 = vsub.s32 %v381, %v383
        %v385 = vrot.slane %v377, %v384
        %v387 = vunpack.c.l.s4 1983009808
        %v388 = vunpack.c.0.s8 %v387
        %v389 = vlaneseq
        %v390 = vshrl.u32 %v389, 7
        %v391 = vsub.s32 %v388, %v390
        %v392 = vrot.slane %v378, %v391
        %v393 = vcombine.low %v304, %v308
        %v394 = vcombine.high %v304, %v308
        %v396 = vunpack.c.l.s4 1983009808
        %v397 = vunpack.c.0.s8 %v396
        %v398 = vlaneseq
        %v399 = vshrl.u32 %v398, 7
        %v400 = vsub.s32 %v397, %v399
        %v401 = vrot.slane %v393, %v400
        %v403 = vunpack.c.l.s4 1983009808
        %v404 = vunpack.c.0.s8 %v403
        %v405 = vlaneseq
        %v406 = vshrl.u32 %v405, 7
        %v407 = vsub.s32 %v404, %v406
        %v408 = vrot.slane %v394, %v407
        %v409 = vcombine.low %v385, %v401
        %v410 = vcombine.high %v385, %v401
        %v412 = vunpack.c.l.s4 1934713408
        %v413 = vunpack.c.0.s8 %v412
        %v414 = vlaneseq
        %v415 = vshrl.u32 %v414, 7
        %v416 = vsub.s32 %v413, %v415
        %v417 = vrot.slane %v409, %v416
        %v419 = vunpack.c.l.s4 1934713408
        %v420 = vunpack.c.0.s8 %v419
        %v421 = vlaneseq
        %v422 = vshrl.u32 %v421, 7
        %v423 = vsub.s32 %v420, %v422
        %v424 = vrot.slane %v410, %v423
        %v425 = vcombine.low %v392, %v408
        %v426 = vcombine.high %v392, %v408
        %v428 = vunpack.c.l.s4 1934713408
        %v429 = vunpack.c.0.s8 %v428
        %v430 = vlaneseq
        %v431 = vshrl.u32 %v430, 7
        %v432 = vsub.s32 %v429, %v431
        %v433 = vrot.slane %v425, %v432
        %v435 = vunpack.c.l.s4 1934713408
        %v436 = vunpack.c.0.s8 %v435
        %v437 = vlaneseq
        %v438 = vshrl.u32 %v437, 7
        %v439 = vsub.s32 %v436, %v438
        %v440 = vrot.slane %v426, %v439
        %v441 = vcombine.high %v417, 0.0
        %v442 = vcombine.high %v424, 0.0
        %v443 = vcombine.high %v433, 0.0
        %v444 = vcombine.high %v440, 0.0
        %446 = vrot.lane.b32.xlu0 %v373, 16
        %v447 = vpop.permute.xlu0 %446
        %450 = vrot.lane.b32.xlu0 %v356, 32
        %v451 = vpop.permute.xlu0 %450
        %454 = vrot.lane.b32.xlu0 %v374, 48
        %v455 = vpop.permute.xlu0 %454
        %458 = vrot.lane.b32.xlu0 %v365, 64
        %v459 = vpop.permute.xlu0 %458
        %462 = vrot.lane.b32.xlu0 %v375, 80
        %v463 = vpop.permute.xlu0 %462
        %466 = vrot.lane.b32.xlu0 %v372, 96
        %v467 = vpop.permute.xlu0 %466
        %470 = vrot.lane.b32.xlu0 %v376, 112
        %v471 = vpop.permute.xlu0 %470
        %474 = vrot.lane.b32.xlu0 %v441, 16
        %v475 = vpop.permute.xlu0 %474
        %478 = vrot.lane.b32.xlu0 %v424, 32
        %v479 = vpop.permute.xlu0 %478
        %482 = vrot.lane.b32.xlu0 %v442, 48
        %v483 = vpop.permute.xlu0 %482
        %486 = vrot.lane.b32.xlu0 %v433, 64
        %v487 = vpop.permute.xlu0 %486
        %490 = vrot.lane.b32.xlu0 %v443, 80
        %v491 = vpop.permute.xlu0 %490
        %494 = vrot.lane.b32.xlu0 %v440, 96
        %v495 = vpop.permute.xlu0 %494
        %498 = vrot.lane.b32.xlu0 %v444, 112
        %v499 = vpop.permute.xlu0 %498
        %vm501 = vcmask 130048
        %v502 = vsel %vm501, %v349, %v447
        %vm503 = vcmask 261120
        %v504 = vsel %vm503, %v502, %v451
        %vm505 = vcmask 392192
        %v506 = vsel %vm505, %v504, %v455
        %vm507 = vcmask 523264
        %v508 = vsel %vm507, %v506, %v459
        %vm509 = vcmask 654336
        %v510 = vsel %vm509, %v508, %v463
        %vm511 = vcmask 785408
        %v512 = vsel %vm511, %v510, %v467
        %vm513 = vcmask 916480
        %v514 = vsel %vm513, %v512, %v471
        %v515 = vsel %vm501, %v417, %v475
        %v516 = vsel %vm503, %v515, %v479
        %v517 = vsel %vm505, %v516, %v483
        %v518 = vsel %vm507, %v517, %v487
        %v519 = vsel %vm509, %v518, %v491
        %v520 = vsel %vm511, %v519, %v495
        %v521 = vsel %vm513, %v520, %v499
        %v522 = vpack.c.bf16 %v514, %v514
        %v523 = vpack.c.bf16 %v521, %v521
        %v526 = vunpack.c.l.b16 %v522
        %v527 = vunpack.c.l.b16 %v523
        %v528 = vpack.c.b16 %v527, %v526
        %530 = vst [vmem:[#allocation3] sm:$0x33] %v528
        %v531 = vld [vmem:[#allocation2] sm:$0xff]
        %v532 = vld [vmem:[#allocation2 + $0x8] sm:$0xff]
        %v533 = vld [vmem:[#allocation2 + $0x18] sm:$0xff]
        %v534 = vld [vmem:[#allocation2 + $0x20] sm:$0xff]
        %v535 = vld [vmem:[#allocation2 + $0x30] sm:$0xff]
        %v536 = vld [vmem:[#allocation2 + $0x38] sm:$0xff]
        %v537 = vld [vmem:[#allocation2 + $0x48] sm:$0xff]
        %v538 = vld [vmem:[#allocation2 + $0x50] sm:$0xff]
        %547 = vrot.lane.b32.xlu0 %v531, 127
        %v548 = vpop.permute.xlu0 %547
        %549 = vrot.lane.b32.xlu0 %v532, 127
        %v550 = vpop.permute.xlu0 %549
        %551 = vrot.lane.b32.xlu0 %v533, 127
        %v552 = vpop.permute.xlu0 %551
        %553 = vrot.lane.b32.xlu0 %v534, 127
        %v554 = vpop.permute.xlu0 %553
        %555 = vrot.lane.b32.xlu0 %v535, 127
        %v556 = vpop.permute.xlu0 %555
        %557 = vrot.lane.b32.xlu0 %v536, 127
        %v558 = vpop.permute.xlu0 %557
        %559 = vrot.lane.b32.xlu0 %v537, 127
        %v560 = vpop.permute.xlu0 %559
        %561 = vrot.lane.b32.xlu0 %v538, 127
        %v562 = vpop.permute.xlu0 %561
        %v571 = vcombine.low %v548, %v556
        %v572 = vcombine.high %v548, %v556
        %v574 = vunpack.c.l.s4 1983009808
        %v575 = vunpack.c.0.s8 %v574
        %v576 = vlaneseq
        %v577 = vshrl.u32 %v576, 7
        %v578 = vsub.s32 %v575, %v577
        %v579 = vrot.slane %v571, %v578
        %v581 = vunpack.c.l.s4 1983009808
        %v582 = vunpack.c.0.s8 %v581
        %v583 = vlaneseq
        %v584 = vshrl.u32 %v583, 7
        %v585 = vsub.s32 %v582, %v584
        %v586 = vrot.slane %v572, %v585
        %v587 = vcombine.low %v552, %v560
        %v588 = vcombine.high %v552, %v560
        %v590 = vunpack.c.l.s4 1983009808
        %v591 = vunpack.c.0.s8 %v590
        %v592 = vlaneseq
        %v593 = vshrl.u32 %v592, 7
        %v594 = vsub.s32 %v591, %v593
        %v595 = vrot.slane %v587, %v594
        %v597 = vunpack.c.l.s4 1983009808
        %v598 = vunpack.c.0.s8 %v597
        %v599 = vlaneseq
        %v600 = vshrl.u32 %v599, 7
        %v601 = vsub.s32 %v598, %v600
        %v602 = vrot.slane %v588, %v601
        %v603 = vcombine.low %v579, %v595
        %v604 = vcombine.high %v579, %v595
        %v606 = vunpack.c.l.s4 1934713408
        %v607 = vunpack.c.0.s8 %v606
        %v608 = vlaneseq
        %v609 = vshrl.u32 %v608, 7
        %v610 = vsub.s32 %v607, %v609
        %v611 = vrot.slane %v603, %v610
        %v613 = vunpack.c.l.s4 1934713408
        %v614 = vunpack.c.0.s8 %v613
        %v615 = vlaneseq
        %v616 = vshrl.u32 %v615, 7
        %v617 = vsub.s32 %v614, %v616
        %v618 = vrot.slane %v604, %v617
        %v619 = vcombine.low %v586, %v602
        %v620 = vcombine.high %v586, %v602
        %v622 = vunpack.c.l.s4 1934713408
        %v623 = vunpack.c.0.s8 %v622
        %v624 = vlaneseq
        %v625 = vshrl.u32 %v624, 7
        %v626 = vsub.s32 %v623, %v625
        %v627 = vrot.slane %v619, %v626
        %v629 = vunpack.c.l.s4 1934713408
        %v630 = vunpack.c.0.s8 %v629
        %v631 = vlaneseq
        %v632 = vshrl.u32 %v631, 7
        %v633 = vsub.s32 %v630, %v632
        %v634 = vrot.slane %v620, %v633
        %v635 = vcombine.high %v611, 0.0
        %v636 = vcombine.high %v618, 0.0
        %v637 = vcombine.high %v627, 0.0
        %v638 = vcombine.high %v634, 0.0
        %v639 = vcombine.low %v550, %v558
        %v640 = vcombine.high %v550, %v558
        %v642 = vunpack.c.l.s4 1983009808
        %v643 = vunpack.c.0.s8 %v642
        %v644 = vlaneseq
        %v645 = vshrl.u32 %v644, 7
        %v646 = vsub.s32 %v643, %v645
        %v647 = vrot.slane %v639, %v646
        %v649 = vunpack.c.l.s4 1983009808
        %v650 = vunpack.c.0.s8 %v649
        %v651 = vlaneseq
        %v652 = vshrl.u32 %v651, 7
        %v653 = vsub.s32 %v650, %v652
        %v654 = vrot.slane %v640, %v653
        %v655 = vcombine.low %v554, %v562
        %v656 = vcombine.high %v554, %v562
        %v658 = vunpack.c.l.s4 1983009808
        %v659 = vunpack.c.0.s8 %v658
        %v660 = vlaneseq
        %v661 = vshrl.u32 %v660, 7
        %v662 = vsub.s32 %v659, %v661
        %v663 = vrot.slane %v655, %v662
        %v665 = vunpack.c.l.s4 1983009808
        %v666 = vunpack.c.0.s8 %v665
        %v667 = vlaneseq
        %v668 = vshrl.u32 %v667, 7
        %v669 = vsub.s32 %v666, %v668
        %v670 = vrot.slane %v656, %v669
        %v671 = vcombine.low %v647, %v663
        %v672 = vcombine.high %v647, %v663
        %v674 = vunpack.c.l.s4 1934713408
        %v675 = vunpack.c.0.s8 %v674
        %v676 = vlaneseq
        %v677 = vshrl.u32 %v676, 7
        %v678 = vsub.s32 %v675, %v677
        %v679 = vrot.slane %v671, %v678
        %v681 = vunpack.c.l.s4 1934713408
        %v682 = vunpack.c.0.s8 %v681
        %v683 = vlaneseq
        %v684 = vshrl.u32 %v683, 7
        %v685 = vsub.s32 %v682, %v684
        %v686 = vrot.slane %v672, %v685
        %v687 = vcombine.low %v654, %v670
        %v688 = vcombine.high %v654, %v670
        %v690 = vunpack.c.l.s4 1934713408
        %v691 = vunpack.c.0.s8 %v690
        %v692 = vlaneseq
        %v693 = vshrl.u32 %v692, 7
        %v694 = vsub.s32 %v691, %v693
        %v695 = vrot.slane %v687, %v694
        %v697 = vunpack.c.l.s4 1934713408
        %v698 = vunpack.c.0.s8 %v697
        %v699 = vlaneseq
        %v700 = vshrl.u32 %v699, 7
        %v701 = vsub.s32 %v698, %v700
        %v702 = vrot.slane %v688, %v701
        %v703 = vcombine.high %v679, 0.0
        %v704 = vcombine.high %v686, 0.0
        %v705 = vcombine.high %v695, 0.0
        %v706 = vcombine.high %v702, 0.0
        %708 = vrot.lane.b32.xlu0 %v635, 16
        %v709 = vpop.permute.xlu0 %708
        %712 = vrot.lane.b32.xlu0 %v618, 32
        %v713 = vpop.permute.xlu0 %712
        %716 = vrot.lane.b32.xlu0 %v636, 48
        %v717 = vpop.permute.xlu0 %716
        %720 = vrot.lane.b32.xlu0 %v627, 64
        %v721 = vpop.permute.xlu0 %720
        %724 = vrot.lane.b32.xlu0 %v637, 80
        %v725 = vpop.permute.xlu0 %724
        %728 = vrot.lane.b32.xlu0 %v634, 96
        %v729 = vpop.permute.xlu0 %728
        %732 = vrot.lane.b32.xlu0 %v638, 112
        %v733 = vpop.permute.xlu0 %732
        %736 = vrot.lane.b32.xlu0 %v703, 16
        %v737 = vpop.permute.xlu0 %736
        %740 = vrot.lane.b32.xlu0 %v686, 32
        %v741 = vpop.permute.xlu0 %740
        %744 = vrot.lane.b32.xlu0 %v704, 48
        %v745 = vpop.permute.xlu0 %744
        %748 = vrot.lane.b32.xlu0 %v695, 64
        %v749 = vpop.permute.xlu0 %748
        %752 = vrot.lane.b32.xlu0 %v705, 80
        %v753 = vpop.permute.xlu0 %752
        %756 = vrot.lane.b32.xlu0 %v702, 96
        %v757 = vpop.permute.xlu0 %756
        %760 = vrot.lane.b32.xlu0 %v706, 112
        %v761 = vpop.permute.xlu0 %760
        %v763 = vsel %vm501, %v611, %v709
        %v764 = vsel %vm503, %v763, %v713
        %v765 = vsel %vm505, %v764, %v717
        %v766 = vsel %vm507, %v765, %v721
        %v767 = vsel %vm509, %v766, %v725
        %v768 = vsel %vm511, %v767, %v729
        %v769 = vsel %vm513, %v768, %v733
        %v770 = vsel %vm501, %v679, %v737
        %v771 = vsel %vm503, %v770, %v741
        %v772 = vsel %vm505, %v771, %v745
        %v773 = vsel %vm507, %v772, %v749
        %v774 = vsel %vm509, %v773, %v753
        %v775 = vsel %vm511, %v774, %v757
        %v776 = vsel %vm513, %v775, %v761
        %v777 = vpack.c.bf16 %v769, %v769
        %v778 = vpack.c.bf16 %v776, %v776
        %v781 = vunpack.c.l.b16 %v777
        %v782 = vunpack.c.l.b16 %v778
        %v783 = vpack.c.b16 %v782, %v781
        %v784 = vrot.slane %v783, 6
        %786 = vst [vmem:[#allocation3] sm:$0xcc] %v784
        %v787 = vld [vmem:[#allocation2] sm:$0xff]
        %v788 = vld [vmem:[#allocation2 + $0x8] sm:$0xff]
        %v789 = vld [vmem:[#allocation2 + $0x18] sm:$0xff]
        %v790 = vld [vmem:[#allocation2 + $0x20] sm:$0xff]
        %v791 = vld [vmem:[#allocation2 + $0x30] sm:$0xff]
        %v792 = vld [vmem:[#allocation2 + $0x38] sm:$0xff]
        %v793 = vld [vmem:[#allocation2 + $0x48] sm:$0xff]
        %v794 = vld [vmem:[#allocation2 + $0x50] sm:$0xff]
        %803 = vrot.lane.b32.xlu0 %v787, 126
        %v804 = vpop.permute.xlu0 %803
        %805 = vrot.lane.b32.xlu0 %v788, 126
        %v806 = vpop.permute.xlu0 %805
        %807 = vrot.lane.b32.xlu0 %v789, 126
        %v808 = vpop.permute.xlu0 %807
        %809 = vrot.lane.b32.xlu0 %v790, 126
        %v810 = vpop.permute.xlu0 %809
        %811 = vrot.lane.b32.xlu0 %v791, 126
        %v812 = vpop.permute.xlu0 %811
        %813 = vrot.lane.b32.xlu0 %v792, 126
        %v814 = vpop.permute.xlu0 %813
        %815 = vrot.lane.b32.xlu0 %v793, 126
        %v816 = vpop.permute.xlu0 %815
        %817 = vrot.lane.b32.xlu0 %v794, 126
        %v818 = vpop.permute.xlu0 %817
        %v827 = vcombine.low %v804, %v812
        %v828 = vcombine.high %v804, %v812
        %v830 = vunpack.c.l.s4 1983009808
        %v831 = vunpack.c.0.s8 %v830
        %v832 = vlaneseq
        %v833 = vshrl.u32 %v832, 7
        %v834 = vsub.s32 %v831, %v833
        %v835 = vrot.slane %v827, %v834
        %v837 = vunpack.c.l.s4 1983009808
        %v838 = vunpack.c.0.s8 %v837
        %v839 = vlaneseq
        %v840 = vshrl.u32 %v839, 7
        %v841 = vsub.s32 %v838, %v840
        %v842 = vrot.slane %v828, %v841
        %v843 = vcombine.low %v808, %v816
        %v844 = vcombine.high %v808, %v816
        %v846 = vunpack.c.l.s4 1983009808
        %v847 = vunpack.c.0.s8 %v846
        %v848 = vlaneseq
        %v849 = vshrl.u32 %v848, 7
        %v850 = vsub.s32 %v847, %v849
        %v851 = vrot.slane %v843, %v850
        %v853 = vunpack.c.l.s4 1983009808
        %v854 = vunpack.c.0.s8 %v853
        %v855 = vlaneseq
        %v856 = vshrl.u32 %v855, 7
        %v857 = vsub.s32 %v854, %v856
        %v858 = vrot.slane %v844, %v857
        %v859 = vcombine.low %v835, %v851
        %v860 = vcombine.high %v835, %v851
        %v862 = vunpack.c.l.s4 1934713408
        %v863 = vunpack.c.0.s8 %v862
        %v864 = vlaneseq
        %v865 = vshrl.u32 %v864, 7
        %v866 = vsub.s32 %v863, %v865
        %v867 = vrot.slane %v859, %v866
        %v869 = vunpack.c.l.s4 1934713408
        %v870 = vunpack.c.0.s8 %v869
        %v871 = vlaneseq
        %v872 = vshrl.u32 %v871, 7
        %v873 = vsub.s32 %v870, %v872
        %v874 = vrot.slane %v860, %v873
        %v875 = vcombine.low %v842, %v858
        %v876 = vcombine.high %v842, %v858
        %v878 = vunpack.c.l.s4 1934713408
        %v879 = vunpack.c.0.s8 %v878
        %v880 = vlaneseq
        %v881 = vshrl.u32 %v880, 7
        %v882 = vsub.s32 %v879, %v881
        %v883 = vrot.slane %v875, %v882
        %v885 = vunpack.c.l.s4 1934713408
        %v886 = vunpack.c.0.s8 %v885
        %v887 = vlaneseq
        %v888 = vshrl.u32 %v887, 7
        %v889 = vsub.s32 %v886, %v888
        %v890 = vrot.slane %v876, %v889
        %v891 = vcombine.high %v867, 0.0
        %v892 = vcombine.high %v874, 0.0
        %v893 = vcombine.high %v883, 0.0
        %v894 = vcombine.high %v890, 0.0
        %v895 = vcombine.low %v806, %v814
        %v896 = vcombine.high %v806, %v814
        %v898 = vunpack.c.l.s4 1983009808
        %v899 = vunpack.c.0.s8 %v898
        %v900 = vlaneseq
        %v901 = vshrl.u32 %v900, 7
        %v902 = vsub.s32 %v899, %v901
        %v903 = vrot.slane %v895, %v902
        %v905 = vunpack.c.l.s4 1983009808
        %v906 = vunpack.c.0.s8 %v905
        %v907 = vlaneseq
        %v908 = vshrl.u32 %v907, 7
        %v909 = vsub.s32 %v906, %v908
        %v910 = vrot.slane %v896, %v909
        %v911 = vcombine.low %v810, %v818
        %v912 = vcombine.high %v810, %v818
        %v914 = vunpack.c.l.s4 1983009808
        %v915 = vunpack.c.0.s8 %v914
        %v916 = vlaneseq
        %v917 = vshrl.u32 %v916, 7
        %v918 = vsub.s32 %v915, %v917
        %v919 = vrot.slane %v911, %v918
        %v921 = vunpack.c.l.s4 1983009808
        %v922 = vunpack.c.0.s8 %v921
        %v923 = vlaneseq
        %v924 = vshrl.u32 %v923, 7
        %v925 = vsub.s32 %v922, %v924
        %v926 = vrot.slane %v912, %v925
        %v927 = vcombine.low %v903, %v919
        %v928 = vcombine.high %v903, %v919
        %v930 = vunpack.c.l.s4 1934713408
        %v931 = vunpack.c.0.s8 %v930
        %v932 = vlaneseq
        %v933 = vshrl.u32 %v932, 7
        %v934 = vsub.s32 %v931, %v933
        %v935 = vrot.slane %v927, %v934
        %v937 = vunpack.c.l.s4 1934713408
        %v938 = vunpack.c.0.s8 %v937
        %v939 = vlaneseq
        %v940 = vshrl.u32 %v939, 7
        %v941 = vsub.s32 %v938, %v940
        %v942 = vrot.slane %v928, %v941
        %v943 = vcombine.low %v910, %v926
        %v944 = vcombine.high %v910, %v926
        %v946 = vunpack.c.l.s4 1934713408
        %v947 = vunpack.c.0.s8 %v946
        %v948 = vlaneseq
        %v949 = vshrl.u32 %v948, 7
        %v950 = vsub.s32 %v947, %v949
        %v951 = vrot.slane %v943, %v950
        %v953 = vunpack.c.l.s4 1934713408
        %v954 = vunpack.c.0.s8 %v953
        %v955 = vlaneseq
        %v956 = vshrl.u32 %v955, 7
        %v957 = vsub.s32 %v954, %v956
        %v958 = vrot.slane %v944, %v957
        %v959 = vcombine.high %v935, 0.0
        %v960 = vcombine.high %v942, 0.0
        %v961 = vcombine.high %v951, 0.0
        %v962 = vcombine.high %v958, 0.0
        %964 = vrot.lane.b32.xlu0 %v891, 16
        %v965 = vpop.permute.xlu0 %964
        %968 = vrot.lane.b32.xlu0 %v874, 32
        %v969 = vpop.permute.xlu0 %968
        %972 = vrot.lane.b32.xlu0 %v892, 48
        %v973 = vpop.permute.xlu0 %972
        %976 = vrot.lane.b32.xlu0 %v883, 64
        %v977 = vpop.permute.xlu0 %976
        %980 = vrot.lane.b32.xlu0 %v893, 80
        %v981 = vpop.permute.xlu0 %980
        %984 = vrot.lane.b32.xlu0 %v890, 96
        %v985 = vpop.permute.xlu0 %984
        %988 = vrot.lane.b32.xlu0 %v894, 112
        %v989 = vpop.permute.xlu0 %988
        %992 = vrot.lane.b32.xlu0 %v959, 16
        %v993 = vpop.permute.xlu0 %992
        %996 = vrot.lane.b32.xlu0 %v942, 32
        %v997 = vpop.permute.xlu0 %996
        %1000 = vrot.lane.b32.xlu0 %v960, 48
        %v1001 = vpop.permute.xlu0 %1000
        %1004 = vrot.lane.b32.xlu0 %v951, 64
        %v1005 = vpop.permute.xlu0 %1004
        %1008 = vrot.lane.b32.xlu0 %v961, 80
        %v1009 = vpop.permute.xlu0 %1008
        %1012 = vrot.lane.b32.xlu0 %v958, 96
        %v1013 = vpop.permute.xlu0 %1012
        %1016 = vrot.lane.b32.xlu0 %v962, 112
        %v1017 = vpop.permute.xlu0 %1016
        %v1019 = vsel %vm501, %v867, %v965
        %v1020 = vsel %vm503, %v1019, %v969
        %v1021 = vsel %vm505, %v1020, %v973
        %v1022 = vsel %vm507, %v1021, %v977
        %v1023 = vsel %vm509, %v1022, %v981
        %v1024 = vsel %vm511, %v1023, %v985
        %v1025 = vsel %vm513, %v1024, %v989
        %v1026 = vsel %vm501, %v935, %v993
        %v1027 = vsel %vm503, %v1026, %v997
        %v1028 = vsel %vm505, %v1027, %v1001
        %v1029 = vsel %vm507, %v1028, %v1005
        %v1030 = vsel %vm509, %v1029, %v1009
        %v1031 = vsel %vm511, %v1030, %v1013
        %v1032 = vsel %vm513, %v1031, %v1017
        %v1033 = vpack.c.bf16 %v1025, %v1025
        %v1034 = vpack.c.bf16 %v1032, %v1032
        %v1037 = vunpack.c.l.b16 %v1033
        %v1038 = vunpack.c.l.b16 %v1034
        %v1039 = vpack.c.b16 %v1038, %v1037
        %1041 = vst [vmem:[#allocation3 + $0x8] sm:$0x33] %v1039
        %v1042 = vld [vmem:[#allocation2 + $0x1] sm:$0xff]
        %v1043 = vld [vmem:[#allocation2 + $0x9] sm:$0xff]
        %v1044 = vld [vmem:[#allocation2 + $0x19] sm:$0xff]
        %v1045 = vld [vmem:[#allocation2 + $0x21] sm:$0xff]
        %v1046 = vld [vmem:[#allocation2 + $0x31] sm:$0xff]
        %v1047 = vld [vmem:[#allocation2 + $0x39] sm:$0xff]
        %v1048 = vld [vmem:[#allocation2 + $0x49] sm:$0xff]
        %v1049 = vld [vmem:[#allocation2 + $0x51] sm:$0xff]
        %v1050 = vcombine.low %v1042, %v1046
        %v1051 = vcombine.high %v1042, %v1046
        %v1053 = vunpack.c.l.s4 1983009808
        %v1054 = vunpack.c.0.s8 %v1053
        %v1055 = vlaneseq
        %v1056 = vshrl.u32 %v1055, 7
        %v1057 = vsub.s32 %v1054, %v1056
        %v1058 = vrot.slane %v1050, %v1057
        %v1060 = vunpack.c.l.s4 1983009808
        %v1061 = vunpack.c.0.s8 %v1060
        %v1062 = vlaneseq
        %v1063 = vshrl.u32 %v1062, 7
        %v1064 = vsub.s32 %v1061, %v1063
        %v1065 = vrot.slane %v1051, %v1064
        %v1066 = vcombine.low %v1044, %v1048
        %v1067 = vcombine.high %v1044, %v1048
        %v1069 = vunpack.c.l.s4 1983009808
        %v1070 = vunpack.c.0.s8 %v1069
        %v1071 = vlaneseq
        %v1072 = vshrl.u32 %v1071, 7
        %v1073 = vsub.s32 %v1070, %v1072
        %v1074 = vrot.slane %v1066, %v1073
        %v1076 = vunpack.c.l.s4 1983009808
        %v1077 = vunpack.c.0.s8 %v1076
        %v1078 = vlaneseq
        %v1079 = vshrl.u32 %v1078, 7
        %v1080 = vsub.s32 %v1077, %v1079
        %v1081 = vrot.slane %v1067, %v1080
        %v1082 = vcombine.low %v1058, %v1074
        %v1083 = vcombine.high %v1058, %v1074
        %v1085 = vunpack.c.l.s4 1934713408
        %v1086 = vunpack.c.0.s8 %v1085
        %v1087 = vlaneseq
        %v1088 = vshrl.u32 %v1087, 7
        %v1089 = vsub.s32 %v1086, %v1088
        %v1090 = vrot.slane %v1082, %v1089
        %v1092 = vunpack.c.l.s4 1934713408
        %v1093 = vunpack.c.0.s8 %v1092
        %v1094 = vlaneseq
        %v1095 = vshrl.u32 %v1094, 7
        %v1096 = vsub.s32 %v1093, %v1095
        %v1097 = vrot.slane %v1083, %v1096
        %v1098 = vcombine.low %v1065, %v1081
        %v1099 = vcombine.high %v1065, %v1081
        %v1101 = vunpack.c.l.s4 1934713408
        %v1102 = vunpack.c.0.s8 %v1101
        %v1103 = vlaneseq
        %v1104 = vshrl.u32 %v1103, 7
        %v1105 = vsub.s32 %v1102, %v1104
        %v1106 = vrot.slane %v1098, %v1105
        %v1108 = vunpack.c.l.s4 1934713408
        %v1109 = vunpack.c.0.s8 %v1108
        %v1110 = vlaneseq
        %v1111 = vshrl.u32 %v1110, 7
        %v1112 = vsub.s32 %v1109, %v1111
        %v1113 = vrot.slane %v1099, %v1112
        %v1114 = vcombine.high %v1090, 0.0
        %v1115 = vcombine.high %v1097, 0.0
        %v1116 = vcombine.high %v1106, 0.0
        %v1117 = vcombine.high %v1113, 0.0
        %v1118 = vcombine.low %v1043, %v1047
        %v1119 = vcombine.high %v1043, %v1047
        %v1121 = vunpack.c.l.s4 1983009808
        %v1122 = vunpack.c.0.s8 %v1121
        %v1123 = vlaneseq
        %v1124 = vshrl.u32 %v1123, 7
        %v1125 = vsub.s32 %v1122, %v1124
        %v1126 = vrot.slane %v1118, %v1125
        %v1128 = vunpack.c.l.s4 1983009808
        %v1129 = vunpack.c.0.s8 %v1128
        %v1130 = vlaneseq
        %v1131 = vshrl.u32 %v1130, 7
        %v1132 = vsub.s32 %v1129, %v1131
        %v1133 = vrot.slane %v1119, %v1132
        %v1134 = vcombine.low %v1045, %v1049
        %v1135 = vcombine.high %v1045, %v1049
        %v1137 = vunpack.c.l.s4 1983009808
        %v1138 = vunpack.c.0.s8 %v1137
        %v1139 = vlaneseq
        %v1140 = vshrl.u32 %v1139, 7
        %v1141 = vsub.s32 %v1138, %v1140
        %v1142 = vrot.slane %v1134, %v1141
        %v1144 = vunpack.c.l.s4 1983009808
        %v1145 = vunpack.c.0.s8 %v1144
        %v1146 = vlaneseq
        %v1147 = vshrl.u32 %v1146, 7
        %v1148 = vsub.s32 %v1145, %v1147
        %v1149 = vrot.slane %v1135, %v1148
        %v1150 = vcombine.low %v1126, %v1142
        %v1151 = vcombine.high %v1126, %v1142
        %v1153 = vunpack.c.l.s4 1934713408
        %v1154 = vunpack.c.0.s8 %v1153
        %v1155 = vlaneseq
        %v1156 = vshrl.u32 %v1155, 7
        %v1157 = vsub.s32 %v1154, %v1156
        %v1158 = vrot.slane %v1150, %v1157
        %v1160 = vunpack.c.l.s4 1934713408
        %v1161 = vunpack.c.0.s8 %v1160
        %v1162 = vlaneseq
        %v1163 = vshrl.u32 %v1162, 7
        %v1164 = vsub.s32 %v1161, %v1163
        %v1165 = vrot.slane %v1151, %v1164
        %v1166 = vcombine.low %v1133, %v1149
        %v1167 = vcombine.high %v1133, %v1149
        %v1169 = vunpack.c.l.s4 1934713408
        %v1170 = vunpack.c.0.s8 %v1169
        %v1171 = vlaneseq
        %v1172 = vshrl.u32 %v1171, 7
        %v1173 = vsub.s32 %v1170, %v1172
        %v1174 = vrot.slane %v1166, %v1173
        %v1176 = vunpack.c.l.s4 1934713408
        %v1177 = vunpack.c.0.s8 %v1176
        %v1178 = vlaneseq
        %v1179 = vshrl.u32 %v1178, 7
        %v1180 = vsub.s32 %v1177, %v1179
        %v1181 = vrot.slane %v1167, %v1180
        %v1182 = vcombine.high %v1158, 0.0
        %v1183 = vcombine.high %v1165, 0.0
        %v1184 = vcombine.high %v1174, 0.0
        %v1185 = vcombine.high %v1181, 0.0
        %1187 = vrot.lane.b32.xlu0 %v1114, 16
        %v1188 = vpop.permute.xlu0 %1187
        %1191 = vrot.lane.b32.xlu0 %v1097, 32
        %v1192 = vpop.permute.xlu0 %1191
        %1195 = vrot.lane.b32.xlu0 %v1115, 48
        %v1196 = vpop.permute.xlu0 %1195
        %1199 = vrot.lane.b32.xlu0 %v1106, 64
        %v1200 = vpop.permute.xlu0 %1199
        %1203 = vrot.lane.b32.xlu0 %v1116, 80
        %v1204 = vpop.permute.xlu0 %1203
        %1207 = vrot.lane.b32.xlu0 %v1113, 96
        %v1208 = vpop.permute.xlu0 %1207
        %1211 = vrot.lane.b32.xlu0 %v1117, 112
        %v1212 = vpop.permute.xlu0 %1211
        %1215 = vrot.lane.b32.xlu0 %v1182, 16
        %v1216 = vpop.permute.xlu0 %1215
        %1219 = vrot.lane.b32.xlu0 %v1165, 32
        %v1220 = vpop.permute.xlu0 %1219
        %1223 = vrot.lane.b32.xlu0 %v1183, 48
        %v1224 = vpop.permute.xlu0 %1223
        %1227 = vrot.lane.b32.xlu0 %v1174, 64
        %v1228 = vpop.permute.xlu0 %1227
        %1231 = vrot.lane.b32.xlu0 %v1184, 80
        %v1232 = vpop.permute.xlu0 %1231
        %1235 = vrot.lane.b32.xlu0 %v1181, 96
        %v1236 = vpop.permute.xlu0 %1235
        %1239 = vrot.lane.b32.xlu0 %v1185, 112
        %v1240 = vpop.permute.xlu0 %1239
        %v1242 = vsel %vm501, %v1090, %v1188
        %v1243 = vsel %vm503, %v1242, %v1192
        %v1244 = vsel %vm505, %v1243, %v1196
        %v1245 = vsel %vm507, %v1244, %v1200
        %v1246 = vsel %vm509, %v1245, %v1204
        %v1247 = vsel %vm511, %v1246, %v1208
        %v1248 = vsel %vm513, %v1247, %v1212
        %v1249 = vsel %vm501, %v1158, %v1216
        %v1250 = vsel %vm503, %v1249, %v1220
        %v1251 = vsel %vm505, %v1250, %v1224
        %v1252 = vsel %vm507, %v1251, %v1228
        %v1253 = vsel %vm509, %v1252, %v1232
        %v1254 = vsel %vm511, %v1253, %v1236
        %v1255 = vsel %vm513, %v1254, %v1240
        %v1256 = vpack.c.bf16 %v1248, %v1248
        %v1257 = vpack.c.bf16 %v1255, %v1255
        %v1260 = vunpack.c.l.b16 %v1256
        %v1261 = vunpack.c.l.b16 %v1257
        %v1262 = vpack.c.b16 %v1261, %v1260
        %v1263 = vrot.slane %v1262, 6
        %1265 = vst [vmem:[#allocation3 + $0x8] sm:$0xcc] %v1263
        %v1266 = vld [vmem:[#allocation2 + $0x1] sm:$0xff]
        %v1267 = vld [vmem:[#allocation2 + $0x9] sm:$0xff]
        %v1268 = vld [vmem:[#allocation2 + $0x19] sm:$0xff]
        %v1269 = vld [vmem:[#allocation2 + $0x21] sm:$0xff]
        %v1270 = vld [vmem:[#allocation2 + $0x31] sm:$0xff]
        %v1271 = vld [vmem:[#allocation2 + $0x39] sm:$0xff]
        %v1272 = vld [vmem:[#allocation2 + $0x49] sm:$0xff]
        %v1273 = vld [vmem:[#allocation2 + $0x51] sm:$0xff]
        %1282 = vrot.lane.b32.xlu0 %v1266, 127
        %v1283 = vpop.permute.xlu0 %1282
        %1284 = vrot.lane.b32.xlu0 %v1267, 127
        %v1285 = vpop.permute.xlu0 %1284
        %1286 = vrot.lane.b32.xlu0 %v1268, 127
        %v1287 = vpop.permute.xlu0 %1286
        %1288 = vrot.lane.b32.xlu0 %v1269, 127
        %v1289 = vpop.permute.xlu0 %1288
        %1290 = vrot.lane.b32.xlu0 %v1270, 127
        %v1291 = vpop.permute.xlu0 %1290
        %1292 = vrot.lane.b32.xlu0 %v1271, 127
        %v1293 = vpop.permute.xlu0 %1292
        %1294 = vrot.lane.b32.xlu0 %v1272, 127
        %v1295 = vpop.permute.xlu0 %1294
        %1296 = vrot.lane.b32.xlu0 %v1273, 127
        %v1297 = vpop.permute.xlu0 %1296
        %v1306 = vcombine.low %v1283, %v1291
        %v1307 = vcombine.high %v1283, %v1291
        %v1309 = vunpack.c.l.s4 1983009808
        %v1310 = vunpack.c.0.s8 %v1309
        %v1311 = vlaneseq
        %v1312 = vshrl.u32 %v1311, 7
        %v1313 = vsub.s32 %v1310, %v1312
        %v1314 = vrot.slane %v1306, %v1313
        %v1316 = vunpack.c.l.s4 1983009808
        %v1317 = vunpack.c.0.s8 %v1316
        %v1318 = vlaneseq
        %v1319 = vshrl.u32 %v1318, 7
        %v1320 = vsub.s32 %v1317, %v1319
        %v1321 = vrot.slane %v1307, %v1320
        %v1322 = vcombine.low %v1287, %v1295
        %v1323 = vcombine.high %v1287, %v1295
        %v1325 = vunpack.c.l.s4 1983009808
        %v1326 = vunpack.c.0.s8 %v1325
        %v1327 = vlaneseq
        %v1328 = vshrl.u32 %v1327, 7
        %v1329 = vsub.s32 %v1326, %v1328
        %v1330 = vrot.slane %v1322, %v1329
        %v1332 = vunpack.c.l.s4 1983009808
        %v1333 = vunpack.c.0.s8 %v1332
        %v1334 = vlaneseq
        %v1335 = vshrl.u32 %v1334, 7
        %v1336 = vsub.s32 %v1333, %v1335
        %v1337 = vrot.slane %v1323, %v1336
        %v1338 = vcombine.low %v1314, %v1330
        %v1339 = vcombine.high %v1314, %v1330
        %v1341 = vunpack.c.l.s4 1934713408
        %v1342 = vunpack.c.0.s8 %v1341
        %v1343 = vlaneseq
        %v1344 = vshrl.u32 %v1343, 7
        %v1345 = vsub.s32 %v1342, %v1344
        %v1346 = vrot.slane %v1338, %v1345
        %v1348 = vunpack.c.l.s4 1934713408
        %v1349 = vunpack.c.0.s8 %v1348
        %v1350 = vlaneseq
        %v1351 = vshrl.u32 %v1350, 7
        %v1352 = vsub.s32 %v1349, %v1351
        %v1353 = vrot.slane %v1339, %v1352
        %v1354 = vcombine.low %v1321, %v1337
        %v1355 = vcombine.high %v1321, %v1337
        %v1357 = vunpack.c.l.s4 1934713408
        %v1358 = vunpack.c.0.s8 %v1357
        %v1359 = vlaneseq
        %v1360 = vshrl.u32 %v1359, 7
        %v1361 = vsub.s32 %v1358, %v1360
        %v1362 = vrot.slane %v1354, %v1361
        %v1364 = vunpack.c.l.s4 1934713408
        %v1365 = vunpack.c.0.s8 %v1364
        %v1366 = vlaneseq
        %v1367 = vshrl.u32 %v1366, 7
        %v1368 = vsub.s32 %v1365, %v1367
        %v1369 = vrot.slane %v1355, %v1368
        %v1370 = vcombine.high %v1346, 0.0
        %v1371 = vcombine.high %v1353, 0.0
        %v1372 = vcombine.high %v1362, 0.0
        %v1373 = vcombine.high %v1369, 0.0
        %v1374 = vcombine.low %v1285, %v1293
        %v1375 = vcombine.high %v1285, %v1293
        %v1377 = vunpack.c.l.s4 1983009808
        %v1378 = vunpack.c.0.s8 %v1377
        %v1379 = vlaneseq
        %v1380 = vshrl.u32 %v1379, 7
        %v1381 = vsub.s32 %v1378, %v1380
        %v1382 = vrot.slane %v1374, %v1381
        %v1384 = vunpack.c.l.s4 1983009808
        %v1385 = vunpack.c.0.s8 %v1384
        %v1386 = vlaneseq
        %v1387 = vshrl.u32 %v1386, 7
        %v1388 = vsub.s32 %v1385, %v1387
        %v1389 = vrot.slane %v1375, %v1388
        %v1390 = vcombine.low %v1289, %v1297
        %v1391 = vcombine.high %v1289, %v1297
        %v1393 = vunpack.c.l.s4 1983009808
        %v1394 = vunpack.c.0.s8 %v1393
        %v1395 = vlaneseq
        %v1396 = vshrl.u32 %v1395, 7
        %v1397 = vsub.s32 %v1394, %v1396
        %v1398 = vrot.slane %v1390, %v1397
        %v1400 = vunpack.c.l.s4 1983009808
        %v1401 = vunpack.c.0.s8 %v1400
        %v1402 = vlaneseq
        %v1403 = vshrl.u32 %v1402, 7
        %v1404 = vsub.s32 %v1401, %v1403
        %v1405 = vrot.slane %v1391, %v1404
        %v1406 = vcombine.low %v1382, %v1398
        %v1407 = vcombine.high %v1382, %v1398
        %v1409 = vunpack.c.l.s4 1934713408
        %v1410 = vunpack.c.0.s8 %v1409
        %v1411 = vlaneseq
        %v1412 = vshrl.u32 %v1411, 7
        %v1413 = vsub.s32 %v1410, %v1412
        %v1414 = vrot.slane %v1406, %v1413
        %v1416 = vunpack.c.l.s4 1934713408
        %v1417 = vunpack.c.0.s8 %v1416
        %v1418 = vlaneseq
        %v1419 = vshrl.u32 %v1418, 7
        %v1420 = vsub.s32 %v1417, %v1419
        %v1421 = vrot.slane %v1407, %v1420
        %v1422 = vcombine.low %v1389, %v1405
        %v1423 = vcombine.high %v1389, %v1405
        %v1425 = vunpack.c.l.s4 1934713408
        %v1426 = vunpack.c.0.s8 %v1425
        %v1427 = vlaneseq
        %v1428 = vshrl.u32 %v1427, 7
        %v1429 = vsub.s32 %v1426, %v1428
        %v1430 = vrot.slane %v1422, %v1429
        %v1432 = vunpack.c.l.s4 1934713408
        %v1433 = vunpack.c.0.s8 %v1432
        %v1434 = vlaneseq
        %v1435 = vshrl.u32 %v1434, 7
        %v1436 = vsub.s32 %v1433, %v1435
        %v1437 = vrot.slane %v1423, %v1436
        %v1438 = vcombine.high %v1414, 0.0
        %v1439 = vcombine.high %v1421, 0.0
        %v1440 = vcombine.high %v1430, 0.0
        %v1441 = vcombine.high %v1437, 0.0
        %1443 = vrot.lane.b32.xlu0 %v1370, 16
        %v1444 = vpop.permute.xlu0 %1443
        %1447 = vrot.lane.b32.xlu0 %v1353, 32
        %v1448 = vpop.permute.xlu0 %1447
        %1451 = vrot.lane.b32.xlu0 %v1371, 48
        %v1452 = vpop.permute.xlu0 %1451
        %1455 = vrot.lane.b32.xlu0 %v1362, 64
        %v1456 = vpop.permute.xlu0 %1455
        %1459 = vrot.lane.b32.xlu0 %v1372, 80
        %v1460 = vpop.permute.xlu0 %1459
        %1463 = vrot.lane.b32.xlu0 %v1369, 96
        %v1464 = vpop.permute.xlu0 %1463
        %1467 = vrot.lane.b32.xlu0 %v1373, 112
        %v1468 = vpop.permute.xlu0 %1467
        %1471 = vrot.lane.b32.xlu0 %v1438, 16
        %v1472 = vpop.permute.xlu0 %1471
        %1475 = vrot.lane.b32.xlu0 %v1421, 32
        %v1476 = vpop.permute.xlu0 %1475
        %1479 = vrot.lane.b32.xlu0 %v1439, 48
        %v1480 = vpop.permute.xlu0 %1479
        %1483 = vrot.lane.b32.xlu0 %v1430, 64
        %v1484 = vpop.permute.xlu0 %1483
        %1487 = vrot.lane.b32.xlu0 %v1440, 80
        %v1488 = vpop.permute.xlu0 %1487
        %1491 = vrot.lane.b32.xlu0 %v1437, 96
        %v1492 = vpop.permute.xlu0 %1491
        %1495 = vrot.lane.b32.xlu0 %v1441, 112
        %v1496 = vpop.permute.xlu0 %1495
        %v1498 = vsel %vm501, %v1346, %v1444
        %v1499 = vsel %vm503, %v1498, %v1448
        %v1500 = vsel %vm505, %v1499, %v1452
        %v1501 = vsel %vm507, %v1500, %v1456
        %v1502 = vsel %vm509, %v1501, %v1460
        %v1503 = vsel %vm511, %v1502, %v1464
        %v1504 = vsel %vm513, %v1503, %v1468
        %v1505 = vsel %vm501, %v1414, %v1472
        %v1506 = vsel %vm503, %v1505, %v1476
        %v1507 = vsel %vm505, %v1506, %v1480
        %v1508 = vsel %vm507, %v1507, %v1484
        %v1509 = vsel %vm509, %v1508, %v1488
        %v1510 = vsel %vm511, %v1509, %v1492
        %v1511 = vsel %vm513, %v1510, %v1496
        %v1512 = vpack.c.bf16 %v1504, %v1504
        %v1513 = vpack.c.bf16 %v1511, %v1511
        %v1516 = vunpack.c.l.b16 %v1512
        %v1517 = vunpack.c.l.b16 %v1513
        %v1518 = vpack.c.b16 %v1517, %v1516
        %1520 = vst [vmem:[#allocation3 + $0x10] sm:$0x33] %v1518
        %v1521 = vld [vmem:[#allocation2 + $0x1] sm:$0xff]
        %v1522 = vld [vmem:[#allocation2 + $0x9] sm:$0xff]
        %v1523 = vld [vmem:[#allocation2 + $0x19] sm:$0xff]
        %v1524 = vld [vmem:[#allocation2 + $0x21] sm:$0xff]
        %v1525 = vld [vmem:[#allocation2 + $0x31] sm:$0xff]
        %v1526 = vld [vmem:[#allocation2 + $0x39] sm:$0xff]
        %v1527 = vld [vmem:[#allocation2 + $0x49] sm:$0xff]
        %v1528 = vld [vmem:[#allocation2 + $0x51] sm:$0xff]
        %1537 = vrot.lane.b32.xlu0 %v1521, 126
        %v1538 = vpop.permute.xlu0 %1537
        %1539 = vrot.lane.b32.xlu0 %v1522, 126
        %v1540 = vpop.permute.xlu0 %1539
        %1541 = vrot.lane.b32.xlu0 %v1523, 126
        %v1542 = vpop.permute.xlu0 %1541
        %1543 = vrot.lane.b32.xlu0 %v1524, 126
        %v1544 = vpop.permute.xlu0 %1543
        %1545 = vrot.lane.b32.xlu0 %v1525, 126
        %v1546 = vpop.permute.xlu0 %1545
        %1547 = vrot.lane.b32.xlu0 %v1526, 126
        %v1548 = vpop.permute.xlu0 %1547
        %1549 = vrot.lane.b32.xlu0 %v1527, 126
        %v1550 = vpop.permute.xlu0 %1549
        %1551 = vrot.lane.b32.xlu0 %v1528, 126
        %v1552 = vpop.permute.xlu0 %1551
        %v1561 = vcombine.low %v1538, %v1546
        %v1562 = vcombine.high %v1538, %v1546
        %v1564 = vunpack.c.l.s4 1983009808
        %v1565 = vunpack.c.0.s8 %v1564
        %v1566 = vlaneseq
        %v1567 = vshrl.u32 %v1566, 7
        %v1568 = vsub.s32 %v1565, %v1567
        %v1569 = vrot.slane %v1561, %v1568
        %v1571 = vunpack.c.l.s4 1983009808
        %v1572 = vunpack.c.0.s8 %v1571
        %v1573 = vlaneseq
        %v1574 = vshrl.u32 %v1573, 7
        %v1575 = vsub.s32 %v1572, %v1574
        %v1576 = vrot.slane %v1562, %v1575
        %v1577 = vcombine.low %v1542, %v1550
        %v1578 = vcombine.high %v1542, %v1550
        %v1580 = vunpack.c.l.s4 1983009808
        %v1581 = vunpack.c.0.s8 %v1580
        %v1582 = vlaneseq
        %v1583 = vshrl.u32 %v1582, 7
        %v1584 = vsub.s32 %v1581, %v1583
        %v1585 = vrot.slane %v1577, %v1584
        %v1587 = vunpack.c.l.s4 1983009808
        %v1588 = vunpack.c.0.s8 %v1587
        %v1589 = vlaneseq
        %v1590 = vshrl.u32 %v1589, 7
        %v1591 = vsub.s32 %v1588, %v1590
        %v1592 = vrot.slane %v1578, %v1591
        %v1593 = vcombine.low %v1569, %v1585
        %v1594 = vcombine.high %v1569, %v1585
        %v1596 = vunpack.c.l.s4 1934713408
        %v1597 = vunpack.c.0.s8 %v1596
        %v1598 = vlaneseq
        %v1599 = vshrl.u32 %v1598, 7
        %v1600 = vsub.s32 %v1597, %v1599
        %v1601 = vrot.slane %v1593, %v1600
        %v1603 = vunpack.c.l.s4 1934713408
        %v1604 = vunpack.c.0.s8 %v1603
        %v1605 = vlaneseq
        %v1606 = vshrl.u32 %v1605, 7
        %v1607 = vsub.s32 %v1604, %v1606
        %v1608 = vrot.slane %v1594, %v1607
        %v1609 = vcombine.low %v1576, %v1592
        %v1610 = vcombine.high %v1576, %v1592
        %v1612 = vunpack.c.l.s4 1934713408
        %v1613 = vunpack.c.0.s8 %v1612
        %v1614 = vlaneseq
        %v1615 = vshrl.u32 %v1614, 7
        %v1616 = vsub.s32 %v1613, %v1615
        %v1617 = vrot.slane %v1609, %v1616
        %v1619 = vunpack.c.l.s4 1934713408
        %v1620 = vunpack.c.0.s8 %v1619
        %v1621 = vlaneseq
        %v1622 = vshrl.u32 %v1621, 7
        %v1623 = vsub.s32 %v1620, %v1622
        %v1624 = vrot.slane %v1610, %v1623
        %v1625 = vcombine.high %v1601, 0.0
        %v1626 = vcombine.high %v1608, 0.0
        %v1627 = vcombine.high %v1617, 0.0
        %v1628 = vcombine.high %v1624, 0.0
        %v1629 = vcombine.low %v1540, %v1548
        %v1630 = vcombine.high %v1540, %v1548
        %v1632 = vunpack.c.l.s4 1983009808
        %v1633 = vunpack.c.0.s8 %v1632
        %v1634 = vlaneseq
        %v1635 = vshrl.u32 %v1634, 7
        %v1636 = vsub.s32 %v1633, %v1635
        %v1637 = vrot.slane %v1629, %v1636
        %v1639 = vunpack.c.l.s4 1983009808
        %v1640 = vunpack.c.0.s8 %v1639
        %v1641 = vlaneseq
        %v1642 = vshrl.u32 %v1641, 7
        %v1643 = vsub.s32 %v1640, %v1642
        %v1644 = vrot.slane %v1630, %v1643
        %v1645 = vcombine.low %v1544, %v1552
        %v1646 = vcombine.high %v1544, %v1552
        %v1648 = vunpack.c.l.s4 1983009808
        %v1649 = vunpack.c.0.s8 %v1648
        %v1650 = vlaneseq
        %v1651 = vshrl.u32 %v1650, 7
        %v1652 = vsub.s32 %v1649, %v1651
        %v1653 = vrot.slane %v1645, %v1652
        %v1655 = vunpack.c.l.s4 1983009808
        %v1656 = vunpack.c.0.s8 %v1655
        %v1657 = vlaneseq
        %v1658 = vshrl.u32 %v1657, 7
        %v1659 = vsub.s32 %v1656, %v1658
        %v1660 = vrot.slane %v1646, %v1659
        %v1661 = vcombine.low %v1637, %v1653
        %v1662 = vcombine.high %v1637, %v1653
        %v1664 = vunpack.c.l.s4 1934713408
        %v1665 = vunpack.c.0.s8 %v1664
        %v1666 = vlaneseq
        %v1667 = vshrl.u32 %v1666, 7
        %v1668 = vsub.s32 %v1665, %v1667
        %v1669 = vrot.slane %v1661, %v1668
        %v1671 = vunpack.c.l.s4 1934713408
        %v1672 = vunpack.c.0.s8 %v1671
        %v1673 = vlaneseq
        %v1674 = vshrl.u32 %v1673, 7
        %v1675 = vsub.s32 %v1672, %v1674
        %v1676 = vrot.slane %v1662, %v1675
        %v1677 = vcombine.low %v1644, %v1660
        %v1678 = vcombine.high %v1644, %v1660
        %v1680 = vunpack.c.l.s4 1934713408
        %v1681 = vunpack.c.0.s8 %v1680
        %v1682 = vlaneseq
        %v1683 = vshrl.u32 %v1682, 7
        %v1684 = vsub.s32 %v1681, %v1683
        %v1685 = vrot.slane %v1677, %v1684
        %v1687 = vunpack.c.l.s4 1934713408
        %v1688 = vunpack.c.0.s8 %v1687
        %v1689 = vlaneseq
        %v1690 = vshrl.u32 %v1689, 7
        %v1691 = vsub.s32 %v1688, %v1690
        %v1692 = vrot.slane %v1678, %v1691
        %v1693 = vcombine.high %v1669, 0.0
        %v1694 = vcombine.high %v1676, 0.0
        %v1695 = vcombine.high %v1685, 0.0
        %v1696 = vcombine.high %v1692, 0.0
        %1698 = vrot.lane.b32.xlu0 %v1625, 16
        %v1699 = vpop.permute.xlu0 %1698
        %1702 = vrot.lane.b32.xlu0 %v1608, 32
        %v1703 = vpop.permute.xlu0 %1702
        %1706 = vrot.lane.b32.xlu0 %v1626, 48
        %v1707 = vpop.permute.xlu0 %1706
        %1710 = vrot.lane.b32.xlu0 %v1617, 64
        %v1711 = vpop.permute.xlu0 %1710
        %1714 = vrot.lane.b32.xlu0 %v1627, 80
        %v1715 = vpop.permute.xlu0 %1714
        %1718 = vrot.lane.b32.xlu0 %v1624, 96
        %v1719 = vpop.permute.xlu0 %1718
        %1722 = vrot.lane.b32.xlu0 %v1628, 112
        %v1723 = vpop.permute.xlu0 %1722
        %1726 = vrot.lane.b32.xlu0 %v1693, 16
        %v1727 = vpop.permute.xlu0 %1726
        %1730 = vrot.lane.b32.xlu0 %v1676, 32
        %v1731 = vpop.permute.xlu0 %1730
        %1734 = vrot.lane.b32.xlu0 %v1694, 48
        %v1735 = vpop.permute.xlu0 %1734
        %1738 = vrot.lane.b32.xlu0 %v1685, 64
        %v1739 = vpop.permute.xlu0 %1738
        %1742 = vrot.lane.b32.xlu0 %v1695, 80
        %v1743 = vpop.permute.xlu0 %1742
        %1746 = vrot.lane.b32.xlu0 %v1692, 96
        %v1747 = vpop.permute.xlu0 %1746
        %1750 = vrot.lane.b32.xlu0 %v1696, 112
        %v1751 = vpop.permute.xlu0 %1750
        %v1753 = vsel %vm501, %v1601, %v1699
        %v1754 = vsel %vm503, %v1753, %v1703
        %v1755 = vsel %vm505, %v1754, %v1707
        %v1756 = vsel %vm507, %v1755, %v1711
        %v1757 = vsel %vm509, %v1756, %v1715
        %v1758 = vsel %vm511, %v1757, %v1719
        %v1759 = vsel %vm513, %v1758, %v1723
        %v1760 = vsel %vm501, %v1669, %v1727
        %v1761 = vsel %vm503, %v1760, %v1731
        %v1762 = vsel %vm505, %v1761, %v1735
        %v1763 = vsel %vm507, %v1762, %v1739
        %v1764 = vsel %vm509, %v1763, %v1743
        %v1765 = vsel %vm511, %v1764, %v1747
        %v1766 = vsel %vm513, %v1765, %v1751
        %v1767 = vpack.c.bf16 %v1759, %v1759
        %v1768 = vpack.c.bf16 %v1766, %v1766
        %v1771 = vunpack.c.l.b16 %v1767
        %v1772 = vunpack.c.l.b16 %v1768
        %v1773 = vpack.c.b16 %v1772, %v1771
        %v1774 = vrot.slane %v1773, 6
        %1776 = vst [vmem:[#allocation3 + $0x10] sm:$0xcc] %v1774
        %v1777 = vld [vmem:[#allocation2 + $0x2] sm:$0xff]
        %v1778 = vld [vmem:[#allocation2 + $0xa] sm:$0xff]
        %v1779 = vld [vmem:[#allocation2 + $0x1a] sm:$0xff]
        %v1780 = vld [vmem:[#allocation2 + $0x22] sm:$0xff]
        %v1781 = vld [vmem:[#allocation2 + $0x32] sm:$0xff]
        %v1782 = vld [vmem:[#allocation2 + $0x3a] sm:$0xff]
        %v1783 = vld [vmem:[#allocation2 + $0x4a] sm:$0xff]
        %v1784 = vld [vmem:[#allocation2 + $0x52] sm:$0xff]
        %v1785 = vcombine.low %v1777, %v1781
        %v1786 = vcombine.high %v1777, %v1781
        %v1788 = vunpack.c.l.s4 1983009808
        %v1789 = vunpack.c.0.s8 %v1788
        %v1790 = vlaneseq
        %v1791 = vshrl.u32 %v1790, 7
        %v1792 = vsub.s32 %v1789, %v1791
        %v1793 = vrot.slane %v1785, %v1792
        %v1795 = vunpack.c.l.s4 1983009808
        %v1796 = vunpack.c.0.s8 %v1795
        %v1797 = vlaneseq
        %v1798 = vshrl.u32 %v1797, 7
        %v1799 = vsub.s32 %v1796, %v1798
        %v1800 = vrot.slane %v1786, %v1799
        %v1801 = vcombine.low %v1779, %v1783
        %v1802 = vcombine.high %v1779, %v1783
        %v1804 = vunpack.c.l.s4 1983009808
        %v1805 = vunpack.c.0.s8 %v1804
        %v1806 = vlaneseq
        %v1807 = vshrl.u32 %v1806, 7
        %v1808 = vsub.s32 %v1805, %v1807
        %v1809 = vrot.slane %v1801, %v1808
        %v1811 = vunpack.c.l.s4 1983009808
        %v1812 = vunpack.c.0.s8 %v1811
        %v1813 = vlaneseq
        %v1814 = vshrl.u32 %v1813, 7
        %v1815 = vsub.s32 %v1812, %v1814
        %v1816 = vrot.slane %v1802, %v1815
        %v1817 = vcombine.low %v1793, %v1809
        %v1818 = vcombine.high %v1793, %v1809
        %v1820 = vunpack.c.l.s4 1934713408
        %v1821 = vunpack.c.0.s8 %v1820
        %v1822 = vlaneseq
        %v1823 = vshrl.u32 %v1822, 7
        %v1824 = vsub.s32 %v1821, %v1823
        %v1825 = vrot.slane %v1817, %v1824
        %v1827 = vunpack.c.l.s4 1934713408
        %v1828 = vunpack.c.0.s8 %v1827
        %v1829 = vlaneseq
        %v1830 = vshrl.u32 %v1829, 7
        %v1831 = vsub.s32 %v1828, %v1830
        %v1832 = vrot.slane %v1818, %v1831
        %v1833 = vcombine.low %v1800, %v1816
        %v1834 = vcombine.high %v1800, %v1816
        %v1836 = vunpack.c.l.s4 1934713408
        %v1837 = vunpack.c.0.s8 %v1836
        %v1838 = vlaneseq
        %v1839 = vshrl.u32 %v1838, 7
        %v1840 = vsub.s32 %v1837, %v1839
        %v1841 = vrot.slane %v1833, %v1840
        %v1843 = vunpack.c.l.s4 1934713408
        %v1844 = vunpack.c.0.s8 %v1843
        %v1845 = vlaneseq
        %v1846 = vshrl.u32 %v1845, 7
        %v1847 = vsub.s32 %v1844, %v1846
        %v1848 = vrot.slane %v1834, %v1847
        %v1849 = vcombine.high %v1825, 0.0
        %v1850 = vcombine.high %v1832, 0.0
        %v1851 = vcombine.high %v1841, 0.0
        %v1852 = vcombine.high %v1848, 0.0
        %v1853 = vcombine.low %v1778, %v1782
        %v1854 = vcombine.high %v1778, %v1782
        %v1856 = vunpack.c.l.s4 1983009808
        %v1857 = vunpack.c.0.s8 %v1856
        %v1858 = vlaneseq
        %v1859 = vshrl.u32 %v1858, 7
        %v1860 = vsub.s32 %v1857, %v1859
        %v1861 = vrot.slane %v1853, %v1860
        %v1863 = vunpack.c.l.s4 1983009808
        %v1864 = vunpack.c.0.s8 %v1863
        %v1865 = vlaneseq
        %v1866 = vshrl.u32 %v1865, 7
        %v1867 = vsub.s32 %v1864, %v1866
        %v1868 = vrot.slane %v1854, %v1867
        %v1869 = vcombine.low %v1780, %v1784
        %v1870 = vcombine.high %v1780, %v1784
        %v1872 = vunpack.c.l.s4 1983009808
        %v1873 = vunpack.c.0.s8 %v1872
        %v1874 = vlaneseq
        %v1875 = vshrl.u32 %v1874, 7
        %v1876 = vsub.s32 %v1873, %v1875
        %v1877 = vrot.slane %v1869, %v1876
        %v1879 = vunpack.c.l.s4 1983009808
        %v1880 = vunpack.c.0.s8 %v1879
        %v1881 = vlaneseq
        %v1882 = vshrl.u32 %v1881, 7
        %v1883 = vsub.s32 %v1880, %v1882
        %v1884 = vrot.slane %v1870, %v1883
        %v1885 = vcombine.low %v1861, %v1877
        %v1886 = vcombine.high %v1861, %v1877
        %v1888 = vunpack.c.l.s4 1934713408
        %v1889 = vunpack.c.0.s8 %v1888
        %v1890 = vlaneseq
        %v1891 = vshrl.u32 %v1890, 7
        %v1892 = vsub.s32 %v1889, %v1891
        %v1893 = vrot.slane %v1885, %v1892
        %v1895 = vunpack.c.l.s4 1934713408
        %v1896 = vunpack.c.0.s8 %v1895
        %v1897 = vlaneseq
        %v1898 = vshrl.u32 %v1897, 7
        %v1899 = vsub.s32 %v1896, %v1898
        %v1900 = vrot.slane %v1886, %v1899
        %v1901 = vcombine.low %v1868, %v1884
        %v1902 = vcombine.high %v1868, %v1884
        %v1904 = vunpack.c.l.s4 1934713408
        %v1905 = vunpack.c.0.s8 %v1904
        %v1906 = vlaneseq
        %v1907 = vshrl.u32 %v1906, 7
        %v1908 = vsub.s32 %v1905, %v1907
        %v1909 = vrot.slane %v1901, %v1908
        %v1911 = vunpack.c.l.s4 1934713408
        %v1912 = vunpack.c.0.s8 %v1911
        %v1913 = vlaneseq
        %v1914 = vshrl.u32 %v1913, 7
        %v1915 = vsub.s32 %v1912, %v1914
        %v1916 = vrot.slane %v1902, %v1915
        %v1917 = vcombine.high %v1893, 0.0
        %v1918 = vcombine.high %v1900, 0.0
        %v1919 = vcombine.high %v1909, 0.0
        %v1920 = vcombine.high %v1916, 0.0
        %1922 = vrot.lane.b32.xlu0 %v1849, 16
        %v1923 = vpop.permute.xlu0 %1922
        %1926 = vrot.lane.b32.xlu0 %v1832, 32
        %v1927 = vpop.permute.xlu0 %1926
        %1930 = vrot.lane.b32.xlu0 %v1850, 48
        %v1931 = vpop.permute.xlu0 %1930
        %1934 = vrot.lane.b32.xlu0 %v1841, 64
        %v1935 = vpop.permute.xlu0 %1934
        %1938 = vrot.lane.b32.xlu0 %v1851, 80
        %v1939 = vpop.permute.xlu0 %1938
        %1942 = vrot.lane.b32.xlu0 %v1848, 96
        %v1943 = vpop.permute.xlu0 %1942
        %1946 = vrot.lane.b32.xlu0 %v1852, 112
        %v1947 = vpop.permute.xlu0 %1946
        %1950 = vrot.lane.b32.xlu0 %v1917, 16
        %v1951 = vpop.permute.xlu0 %1950
        %1954 = vrot.lane.b32.xlu0 %v1900, 32
        %v1955 = vpop.permute.xlu0 %1954
        %1958 = vrot.lane.b32.xlu0 %v1918, 48
        %v1959 = vpop.permute.xlu0 %1958
        %1962 = vrot.lane.b32.xlu0 %v1909, 64
        %v1963 = vpop.permute.xlu0 %1962
        %1966 = vrot.lane.b32.xlu0 %v1919, 80
        %v1967 = vpop.permute.xlu0 %1966
        %1970 = vrot.lane.b32.xlu0 %v1916, 96
        %v1971 = vpop.permute.xlu0 %1970
        %1974 = vrot.lane.b32.xlu0 %v1920, 112
        %v1975 = vpop.permute.xlu0 %1974
        %v1977 = vsel %vm501, %v1825, %v1923
        %v1978 = vsel %vm503, %v1977, %v1927
        %v1979 = vsel %vm505, %v1978, %v1931
        %v1980 = vsel %vm507, %v1979, %v1935
        %v1981 = vsel %vm509, %v1980, %v1939
        %v1982 = vsel %vm511, %v1981, %v1943
        %v1983 = vsel %vm513, %v1982, %v1947
        %v1984 = vsel %vm501, %v1893, %v1951
        %v1985 = vsel %vm503, %v1984, %v1955
        %v1986 = vsel %vm505, %v1985, %v1959
        %v1987 = vsel %vm507, %v1986, %v1963
        %v1988 = vsel %vm509, %v1987, %v1967
        %v1989 = vsel %vm511, %v1988, %v1971
        %v1990 = vsel %vm513, %v1989, %v1975
        %v1991 = vpack.c.bf16 %v1983, %v1983
        %v1992 = vpack.c.bf16 %v1990, %v1990
        %v1995 = vunpack.c.l.b16 %v1991
        %v1996 = vunpack.c.l.b16 %v1992
        %v1997 = vpack.c.b16 %v1996, %v1995
        %1999 = vst [vmem:[#allocation3 + $0x18] sm:$0x33] %v1997
        %v2000 = vld [vmem:[#allocation2 + $0x2] sm:$0xff]
        %v2001 = vld [vmem:[#allocation2 + $0xa] sm:$0xff]
        %v2002 = vld [vmem:[#allocation2 + $0x1a] sm:$0xff]
        %v2003 = vld [vmem:[#allocation2 + $0x22] sm:$0xff]
        %v2004 = vld [vmem:[#allocation2 + $0x32] sm:$0xff]
        %v2005 = vld [vmem:[#allocation2 + $0x3a] sm:$0xff]
        %v2006 = vld [vmem:[#allocation2 + $0x4a] sm:$0xff]
        %v2007 = vld [vmem:[#allocation2 + $0x52] sm:$0xff]
        %2016 = vrot.lane.b32.xlu0 %v2000, 127
        %v2017 = vpop.permute.xlu0 %2016
        %2018 = vrot.lane.b32.xlu0 %v2001, 127
        %v2019 = vpop.permute.xlu0 %2018
        %2020 = vrot.lane.b32.xlu0 %v2002, 127
        %v2021 = vpop.permute.xlu0 %2020
        %2022 = vrot.lane.b32.xlu0 %v2003, 127
        %v2023 = vpop.permute.xlu0 %2022
        %2024 = vrot.lane.b32.xlu0 %v2004, 127
        %v2025 = vpop.permute.xlu0 %2024
        %2026 = vrot.lane.b32.xlu0 %v2005, 127
        %v2027 = vpop.permute.xlu0 %2026
        %2028 = vrot.lane.b32.xlu0 %v2006, 127
        %v2029 = vpop.permute.xlu0 %2028
        %2030 = vrot.lane.b32.xlu0 %v2007, 127
        %v2031 = vpop.permute.xlu0 %2030
        %v2040 = vcombine.low %v2017, %v2025
        %v2041 = vcombine.high %v2017, %v2025
        %v2043 = vunpack.c.l.s4 1983009808
        %v2044 = vunpack.c.0.s8 %v2043
        %v2045 = vlaneseq
        %v2046 = vshrl.u32 %v2045, 7
        %v2047 = vsub.s32 %v2044, %v2046
        %v2048 = vrot.slane %v2040, %v2047
        %v2050 = vunpack.c.l.s4 1983009808
        %v2051 = vunpack.c.0.s8 %v2050
        %v2052 = vlaneseq
        %v2053 = vshrl.u32 %v2052, 7
        %v2054 = vsub.s32 %v2051, %v2053
        %v2055 = vrot.slane %v2041, %v2054
        %v2056 = vcombine.low %v2021, %v2029
        %v2057 = vcombine.high %v2021, %v2029
        %v2059 = vunpack.c.l.s4 1983009808
        %v2060 = vunpack.c.0.s8 %v2059
        %v2061 = vlaneseq
        %v2062 = vshrl.u32 %v2061, 7
        %v2063 = vsub.s32 %v2060, %v2062
        %v2064 = vrot.slane %v2056, %v2063
        %v2066 = vunpack.c.l.s4 1983009808
        %v2067 = vunpack.c.0.s8 %v2066
        %v2068 = vlaneseq
        %v2069 = vshrl.u32 %v2068, 7
        %v2070 = vsub.s32 %v2067, %v2069
        %v2071 = vrot.slane %v2057, %v2070
        %v2072 = vcombine.low %v2048, %v2064
        %v2073 = vcombine.high %v2048, %v2064
        %v2075 = vunpack.c.l.s4 1934713408
        %v2076 = vunpack.c.0.s8 %v2075
        %v2077 = vlaneseq
        %v2078 = vshrl.u32 %v2077, 7
        %v2079 = vsub.s32 %v2076, %v2078
        %v2080 = vrot.slane %v2072, %v2079
        %v2082 = vunpack.c.l.s4 1934713408
        %v2083 = vunpack.c.0.s8 %v2082
        %v2084 = vlaneseq
        %v2085 = vshrl.u32 %v2084, 7
        %v2086 = vsub.s32 %v2083, %v2085
        %v2087 = vrot.slane %v2073, %v2086
        %v2088 = vcombine.low %v2055, %v2071
        %v2089 = vcombine.high %v2055, %v2071
        %v2091 = vunpack.c.l.s4 1934713408
        %v2092 = vunpack.c.0.s8 %v2091
        %v2093 = vlaneseq
        %v2094 = vshrl.u32 %v2093, 7
        %v2095 = vsub.s32 %v2092, %v2094
        %v2096 = vrot.slane %v2088, %v2095
        %v2098 = vunpack.c.l.s4 1934713408
        %v2099 = vunpack.c.0.s8 %v2098
        %v2100 = vlaneseq
        %v2101 = vshrl.u32 %v2100, 7
        %v2102 = vsub.s32 %v2099, %v2101
        %v2103 = vrot.slane %v2089, %v2102
        %v2104 = vcombine.high %v2080, 0.0
        %v2105 = vcombine.high %v2087, 0.0
        %v2106 = vcombine.high %v2096, 0.0
        %v2107 = vcombine.high %v2103, 0.0
        %v2108 = vcombine.low %v2019, %v2027
        %v2109 = vcombine.high %v2019, %v2027
        %v2111 = vunpack.c.l.s4 1983009808
        %v2112 = vunpack.c.0.s8 %v2111
        %v2113 = vlaneseq
        %v2114 = vshrl.u32 %v2113, 7
        %v2115 = vsub.s32 %v2112, %v2114
        %v2116 = vrot.slane %v2108, %v2115
        %v2118 = vunpack.c.l.s4 1983009808
        %v2119 = vunpack.c.0.s8 %v2118
        %v2120 = vlaneseq
        %v2121 = vshrl.u32 %v2120, 7
        %v2122 = vsub.s32 %v2119, %v2121
        %v2123 = vrot.slane %v2109, %v2122
        %v2124 = vcombine.low %v2023, %v2031
        %v2125 = vcombine.high %v2023, %v2031
        %v2127 = vunpack.c.l.s4 1983009808
        %v2128 = vunpack.c.0.s8 %v2127
        %v2129 = vlaneseq
        %v2130 = vshrl.u32 %v2129, 7
        %v2131 = vsub.s32 %v2128, %v2130
        %v2132 = vrot.slane %v2124, %v2131
        %v2134 = vunpack.c.l.s4 1983009808
        %v2135 = vunpack.c.0.s8 %v2134
        %v2136 = vlaneseq
        %v2137 = vshrl.u32 %v2136, 7
        %v2138 = vsub.s32 %v2135, %v2137
        %v2139 = vrot.slane %v2125, %v2138
        %v2140 = vcombine.low %v2116, %v2132
        %v2141 = vcombine.high %v2116, %v2132
        %v2143 = vunpack.c.l.s4 1934713408
        %v2144 = vunpack.c.0.s8 %v2143
        %v2145 = vlaneseq
        %v2146 = vshrl.u32 %v2145, 7
        %v2147 = vsub.s32 %v2144, %v2146
        %v2148 = vrot.slane %v2140, %v2147
        %v2150 = vunpack.c.l.s4 1934713408
        %v2151 = vunpack.c.0.s8 %v2150
        %v2152 = vlaneseq
        %v2153 = vshrl.u32 %v2152, 7
        %v2154 = vsub.s32 %v2151, %v2153
        %v2155 = vrot.slane %v2141, %v2154
        %v2156 = vcombine.low %v2123, %v2139
        %v2157 = vcombine.high %v2123, %v2139
        %v2159 = vunpack.c.l.s4 1934713408
        %v2160 = vunpack.c.0.s8 %v2159
        %v2161 = vlaneseq
        %v2162 = vshrl.u32 %v2161, 7
        %v2163 = vsub.s32 %v2160, %v2162
        %v2164 = vrot.slane %v2156, %v2163
        %v2166 = vunpack.c.l.s4 1934713408
        %v2167 = vunpack.c.0.s8 %v2166
        %v2168 = vlaneseq
        %v2169 = vshrl.u32 %v2168, 7
        %v2170 = vsub.s32 %v2167, %v2169
        %v2171 = vrot.slane %v2157, %v2170
        %v2172 = vcombine.high %v2148, 0.0
        %v2173 = vcombine.high %v2155, 0.0
        %v2174 = vcombine.high %v2164, 0.0
        %v2175 = vcombine.high %v2171, 0.0
        %2177 = vrot.lane.b32.xlu0 %v2104, 16
        %v2178 = vpop.permute.xlu0 %2177
        %2181 = vrot.lane.b32.xlu0 %v2087, 32
        %v2182 = vpop.permute.xlu0 %2181
        %2185 = vrot.lane.b32.xlu0 %v2105, 48
        %v2186 = vpop.permute.xlu0 %2185
        %2189 = vrot.lane.b32.xlu0 %v2096, 64
        %v2190 = vpop.permute.xlu0 %2189
        %2193 = vrot.lane.b32.xlu0 %v2106, 80
        %v2194 = vpop.permute.xlu0 %2193
        %2197 = vrot.lane.b32.xlu0 %v2103, 96
        %v2198 = vpop.permute.xlu0 %2197
        %2201 = vrot.lane.b32.xlu0 %v2107, 112
        %v2202 = vpop.permute.xlu0 %2201
        %2205 = vrot.lane.b32.xlu0 %v2172, 16
        %v2206 = vpop.permute.xlu0 %2205
        %2209 = vrot.lane.b32.xlu0 %v2155, 32
        %v2210 = vpop.permute.xlu0 %2209
        %2213 = vrot.lane.b32.xlu0 %v2173, 48
        %v2214 = vpop.permute.xlu0 %2213
        %2217 = vrot.lane.b32.xlu0 %v2164, 64
        %v2218 = vpop.permute.xlu0 %2217
        %2221 = vrot.lane.b32.xlu0 %v2174, 80
        %v2222 = vpop.permute.xlu0 %2221
        %2225 = vrot.lane.b32.xlu0 %v2171, 96
        %v2226 = vpop.permute.xlu0 %2225
        %2229 = vrot.lane.b32.xlu0 %v2175, 112
        %v2230 = vpop.permute.xlu0 %2229
        %v2232 = vsel %vm501, %v2080, %v2178
        %v2233 = vsel %vm503, %v2232, %v2182
        %v2234 = vsel %vm505, %v2233, %v2186
        %v2235 = vsel %vm507, %v2234, %v2190
        %v2236 = vsel %vm509, %v2235, %v2194
        %v2237 = vsel %vm511, %v2236, %v2198
        %v2238 = vsel %vm513, %v2237, %v2202
        %v2239 = vsel %vm501, %v2148, %v2206
        %v2240 = vsel %vm503, %v2239, %v2210
        %v2241 = vsel %vm505, %v2240, %v2214
        %v2242 = vsel %vm507, %v2241, %v2218
        %v2243 = vsel %vm509, %v2242, %v2222
        %v2244 = vsel %vm511, %v2243, %v2226
        %v2245 = vsel %vm513, %v2244, %v2230
        %v2246 = vpack.c.bf16 %v2238, %v2238
        %v2247 = vpack.c.bf16 %v2245, %v2245
        %v2250 = vunpack.c.l.b16 %v2246
        %v2251 = vunpack.c.l.b16 %v2247
        %v2252 = vpack.c.b16 %v2251, %v2250
        %v2253 = vrot.slane %v2252, 6
        %2255 = vst [vmem:[#allocation3 + $0x18] sm:$0xcc] %v2253
        %v2256 = vld [vmem:[#allocation2 + $0x2] sm:$0xff]
        %v2257 = vld [vmem:[#allocation2 + $0xa] sm:$0xff]
        %v2258 = vld [vmem:[#allocation2 + $0x1a] sm:$0xff]
        %v2259 = vld [vmem:[#allocation2 + $0x22] sm:$0xff]
        %v2260 = vld [vmem:[#allocation2 + $0x32] sm:$0xff]
        %v2261 = vld [vmem:[#allocation2 + $0x3a] sm:$0xff]
        %v2262 = vld [vmem:[#allocation2 + $0x4a] sm:$0xff]
        %v2263 = vld [vmem:[#allocation2 + $0x52] sm:$0xff]
        %2272 = vrot.lane.b32.xlu0 %v2256, 126
        %v2273 = vpop.permute.xlu0 %2272
        %2274 = vrot.lane.b32.xlu0 %v2257, 126
        %v2275 = vpop.permute.xlu0 %2274
        %2276 = vrot.lane.b32.xlu0 %v2258, 126
        %v2277 = vpop.permute.xlu0 %2276
        %2278 = vrot.lane.b32.xlu0 %v2259, 126
        %v2279 = vpop.permute.xlu0 %2278
        %2280 = vrot.lane.b32.xlu0 %v2260, 126
        %v2281 = vpop.permute.xlu0 %2280
        %2282 = vrot.lane.b32.xlu0 %v2261, 126
        %v2283 = vpop.permute.xlu0 %2282
        %2284 = vrot.lane.b32.xlu0 %v2262, 126
        %v2285 = vpop.permute.xlu0 %2284
        %2286 = vrot.lane.b32.xlu0 %v2263, 126
        %v2287 = vpop.permute.xlu0 %2286
        %v2296 = vcombine.low %v2273, %v2281
        %v2297 = vcombine.high %v2273, %v2281
        %v2299 = vunpack.c.l.s4 1983009808
        %v2300 = vunpack.c.0.s8 %v2299
        %v2301 = vlaneseq
        %v2302 = vshrl.u32 %v2301, 7
        %v2303 = vsub.s32 %v2300, %v2302
        %v2304 = vrot.slane %v2296, %v2303
        %v2306 = vunpack.c.l.s4 1983009808
        %v2307 = vunpack.c.0.s8 %v2306
        %v2308 = vlaneseq
        %v2309 = vshrl.u32 %v2308, 7
        %v2310 = vsub.s32 %v2307, %v2309
        %v2311 = vrot.slane %v2297, %v2310
        %v2312 = vcombine.low %v2277, %v2285
        %v2313 = vcombine.high %v2277, %v2285
        %v2315 = vunpack.c.l.s4 1983009808
        %v2316 = vunpack.c.0.s8 %v2315
        %v2317 = vlaneseq
        %v2318 = vshrl.u32 %v2317, 7
        %v2319 = vsub.s32 %v2316, %v2318
        %v2320 = vrot.slane %v2312, %v2319
        %v2322 = vunpack.c.l.s4 1983009808
        %v2323 = vunpack.c.0.s8 %v2322
        %v2324 = vlaneseq
        %v2325 = vshrl.u32 %v2324, 7
        %v2326 = vsub.s32 %v2323, %v2325
        %v2327 = vrot.slane %v2313, %v2326
        %v2328 = vcombine.low %v2304, %v2320
        %v2329 = vcombine.high %v2304, %v2320
        %v2331 = vunpack.c.l.s4 1934713408
        %v2332 = vunpack.c.0.s8 %v2331
        %v2333 = vlaneseq
        %v2334 = vshrl.u32 %v2333, 7
        %v2335 = vsub.s32 %v2332, %v2334
        %v2336 = vrot.slane %v2328, %v2335
        %v2338 = vunpack.c.l.s4 1934713408
        %v2339 = vunpack.c.0.s8 %v2338
        %v2340 = vlaneseq
        %v2341 = vshrl.u32 %v2340, 7
        %v2342 = vsub.s32 %v2339, %v2341
        %v2343 = vrot.slane %v2329, %v2342
        %v2344 = vcombine.low %v2311, %v2327
        %v2345 = vcombine.high %v2311, %v2327
        %v2347 = vunpack.c.l.s4 1934713408
        %v2348 = vunpack.c.0.s8 %v2347
        %v2349 = vlaneseq
        %v2350 = vshrl.u32 %v2349, 7
        %v2351 = vsub.s32 %v2348, %v2350
        %v2352 = vrot.slane %v2344, %v2351
        %v2354 = vunpack.c.l.s4 1934713408
        %v2355 = vunpack.c.0.s8 %v2354
        %v2356 = vlaneseq
        %v2357 = vshrl.u32 %v2356, 7
        %v2358 = vsub.s32 %v2355, %v2357
        %v2359 = vrot.slane %v2345, %v2358
        %v2360 = vcombine.high %v2336, 0.0
        %v2361 = vcombine.high %v2343, 0.0
        %v2362 = vcombine.high %v2352, 0.0
        %v2363 = vcombine.high %v2359, 0.0
        %v2364 = vcombine.low %v2275, %v2283
        %v2365 = vcombine.high %v2275, %v2283
        %v2367 = vunpack.c.l.s4 1983009808
        %v2368 = vunpack.c.0.s8 %v2367
        %v2369 = vlaneseq
        %v2370 = vshrl.u32 %v2369, 7
        %v2371 = vsub.s32 %v2368, %v2370
        %v2372 = vrot.slane %v2364, %v2371
        %v2374 = vunpack.c.l.s4 1983009808
        %v2375 = vunpack.c.0.s8 %v2374
        %v2376 = vlaneseq
        %v2377 = vshrl.u32 %v2376, 7
        %v2378 = vsub.s32 %v2375, %v2377
        %v2379 = vrot.slane %v2365, %v2378
        %v2380 = vcombine.low %v2279, %v2287
        %v2381 = vcombine.high %v2279, %v2287
        %v2383 = vunpack.c.l.s4 1983009808
        %v2384 = vunpack.c.0.s8 %v2383
        %v2385 = vlaneseq
        %v2386 = vshrl.u32 %v2385, 7
        %v2387 = vsub.s32 %v2384, %v2386
        %v2388 = vrot.slane %v2380, %v2387
        %v2390 = vunpack.c.l.s4 1983009808
        %v2391 = vunpack.c.0.s8 %v2390
        %v2392 = vlaneseq
        %v2393 = vshrl.u32 %v2392, 7
        %v2394 = vsub.s32 %v2391, %v2393
        %v2395 = vrot.slane %v2381, %v2394
        %v2396 = vcombine.low %v2372, %v2388
        %v2397 = vcombine.high %v2372, %v2388
        %v2399 = vunpack.c.l.s4 1934713408
        %v2400 = vunpack.c.0.s8 %v2399
        %v2401 = vlaneseq
        %v2402 = vshrl.u32 %v2401, 7
        %v2403 = vsub.s32 %v2400, %v2402
        %v2404 = vrot.slane %v2396, %v2403
        %v2406 = vunpack.c.l.s4 1934713408
        %v2407 = vunpack.c.0.s8 %v2406
        %v2408 = vlaneseq
        %v2409 = vshrl.u32 %v2408, 7
        %v2410 = vsub.s32 %v2407, %v2409
        %v2411 = vrot.slane %v2397, %v2410
        %v2412 = vcombine.low %v2379, %v2395
        %v2413 = vcombine.high %v2379, %v2395
        %v2415 = vunpack.c.l.s4 1934713408
        %v2416 = vunpack.c.0.s8 %v2415
        %v2417 = vlaneseq
        %v2418 = vshrl.u32 %v2417, 7
        %v2419 = vsub.s32 %v2416, %v2418
        %v2420 = vrot.slane %v2412, %v2419
        %v2422 = vunpack.c.l.s4 1934713408
        %v2423 = vunpack.c.0.s8 %v2422
        %v2424 = vlaneseq
        %v2425 = vshrl.u32 %v2424, 7
        %v2426 = vsub.s32 %v2423, %v2425
        %v2427 = vrot.slane %v2413, %v2426
        %v2428 = vcombine.high %v2404, 0.0
        %v2429 = vcombine.high %v2411, 0.0
        %v2430 = vcombine.high %v2420, 0.0
        %v2431 = vcombine.high %v2427, 0.0
        %2433 = vrot.lane.b32.xlu0 %v2360, 16
        %v2434 = vpop.permute.xlu0 %2433
        %2437 = vrot.lane.b32.xlu0 %v2343, 32
        %v2438 = vpop.permute.xlu0 %2437
        %2441 = vrot.lane.b32.xlu0 %v2361, 48
        %v2442 = vpop.permute.xlu0 %2441
        %2445 = vrot.lane.b32.xlu0 %v2352, 64
        %v2446 = vpop.permute.xlu0 %2445
        %2449 = vrot.lane.b32.xlu0 %v2362, 80
        %v2450 = vpop.permute.xlu0 %2449
        %2453 = vrot.lane.b32.xlu0 %v2359, 96
        %v2454 = vpop.permute.xlu0 %2453
        %2457 = vrot.lane.b32.xlu0 %v2363, 112
        %v2458 = vpop.permute.xlu0 %2457
        %2461 = vrot.lane.b32.xlu0 %v2428, 16
        %v2462 = vpop.permute.xlu0 %2461
        %2465 = vrot.lane.b32.xlu0 %v2411, 32
        %v2466 = vpop.permute.xlu0 %2465
        %2469 = vrot.lane.b32.xlu0 %v2429, 48
        %v2470 = vpop.permute.xlu0 %2469
        %2473 = vrot.lane.b32.xlu0 %v2420, 64
        %v2474 = vpop.permute.xlu0 %2473
        %2477 = vrot.lane.b32.xlu0 %v2430, 80
        %v2478 = vpop.permute.xlu0 %2477
        %2481 = vrot.lane.b32.xlu0 %v2427, 96
        %v2482 = vpop.permute.xlu0 %2481
        %2485 = vrot.lane.b32.xlu0 %v2431, 112
        %v2486 = vpop.permute.xlu0 %2485
        %v2488 = vsel %vm501, %v2336, %v2434
        %v2489 = vsel %vm503, %v2488, %v2438
        %v2490 = vsel %vm505, %v2489, %v2442
        %v2491 = vsel %vm507, %v2490, %v2446
        %v2492 = vsel %vm509, %v2491, %v2450
        %v2493 = vsel %vm511, %v2492, %v2454
        %v2494 = vsel %vm513, %v2493, %v2458
        %v2495 = vsel %vm501, %v2404, %v2462
        %v2496 = vsel %vm503, %v2495, %v2466
        %v2497 = vsel %vm505, %v2496, %v2470
        %v2498 = vsel %vm507, %v2497, %v2474
        %v2499 = vsel %vm509, %v2498, %v2478
        %v2500 = vsel %vm511, %v2499, %v2482
        %v2501 = vsel %vm513, %v2500, %v2486
        %v2502 = vpack.c.bf16 %v2494, %v2494
        %v2503 = vpack.c.bf16 %v2501, %v2501
        %v2506 = vunpack.c.l.b16 %v2502
        %v2507 = vunpack.c.l.b16 %v2503
        %v2508 = vpack.c.b16 %v2507, %v2506
        %2510 = vst [vmem:[#allocation3 + $0x20] sm:$0x33] %v2508
        %v2511 = vld [vmem:[%s2] sm:$0xff]
        %v2512 = vld [vmem:[%s2 + $0x8] sm:$0xff]
        %v2513 = vld [vmem:[%s2 + $0x10] sm:$0xff]
        %v2514 = vld [vmem:[%s2 + $0x18] sm:$0xff]
        %v2515 = vld [vmem:[#allocation7] sm:$0xf]
        %v2516 = vld [vmem:[#allocation7 + $0x4] sm:$0xf]
        %v2517 = vld [vmem:[#allocation7 + $0x8] sm:$0xf]
        %v2518 = vld [vmem:[#allocation7 + $0xc] sm:$0xf]
        %v2519 = vld [vmem:[#allocation3] sm:$0xff]
        %v2520 = vld [vmem:[#allocation3 + $0x8] sm:$0xff]
        %v2521 = vld [vmem:[#allocation3 + $0x10] sm:$0xff]
        %v2522 = vld [vmem:[#allocation3 + $0x18] sm:$0xff]
        %v2523 = vld [vmem:[#allocation3 + $0x20] sm:$0xff]
        %v2524 = vld [vmem:[#allocation3 + $0x28] sm:$0xff]
        %2526 = vset.pattern.permute.xlu0 0
        %2527 = vperm.xlu0 %2526, %v2511
        %v2528 = vpop.permute.xlu0 %2527
        %2531 = vset.pattern.permute.xlu0 0
        %2532 = vperm.xlu0 %2531, %v2512
        %v2533 = vpop.permute.xlu0 %2532
        %2536 = vset.pattern.permute.xlu0 0
        %2537 = vperm.xlu0 %2536, %v2513
        %v2538 = vpop.permute.xlu0 %2537
        %2541 = vset.pattern.permute.xlu0 0
        %2542 = vperm.xlu0 %2541, %v2514
        %v2543 = vpop.permute.xlu0 %2542
        %v2549 = vunpack.c.l.b16 %v2515
        %v2550 = vunpack.c.l.b16 %v2516
        %v2551 = vunpack.c.l.b16 %v2517
        %v2552 = vunpack.c.l.b16 %v2518
        %v2553 = vpack.c.b16 %v2550, %v2549
        %v2554 = vpack.c.b16 %v2552, %v2551
        %v2561 = vunpack.c.l.b16 %v2519
        %v2562 = vunpack.c.h.b16 %v2519
        %v2563 = vunpack.c.l.b16 %v2520
        %v2564 = vunpack.c.h.b16 %v2520
        %v2565 = vunpack.c.l.b16 %v2521
        %v2566 = vunpack.c.h.b16 %v2521
        %v2567 = vunpack.c.l.b16 %v2522
        %v2568 = vunpack.c.h.b16 %v2522
        %v2569 = vunpack.c.l.b16 %v2523
        %v2570 = vunpack.c.h.b16 %v2523
        %v2571 = vunpack.c.l.b16 %v2524
        %v2572 = vunpack.c.h.b16 %v2524
        %v2573 = vpack.c.b16 %v2563, %v2561
        %v2574 = vpack.c.b16 %v2564, %v2562
        %v2575 = vpack.c.b16 %v2567, %v2565
        %v2576 = vpack.c.b16 %v2568, %v2566
        %v2577 = vpack.c.b16 %v2571, %v2569
        %v2578 = vpack.c.b16 %v2572, %v2570
        %v2586 = vsel %vm505, %v2553, 0
        %v2589 = vsel %vm505, %v2554, 0
        %2591 = vmatprep.subr.bf16.mxu0 0
        %2592 = vmatpush1.bf16.msra.mxu0 0
        %2593 = vmatprep.subr.bf16.mxu0 0
        %2594 = vmatpush1.bf16.msra.mxu0 0
        %2595 = vmatprep.subr.bf16.mxu0 0
        %2596 = vmatpush1.bf16.msra.mxu0 0
        %2597 = vmatprep.subr.bf16.mxu0 0
        %2598 = vmatpush1.bf16.msra.mxu0 0
        %2599 = vmatprep.subr.bf16.mxu0 0
        %2600 = vmatpush1.bf16.msra.mxu0 0
        %2601 = vmatprep.subr.bf16.mxu0 %v2578
        %2602 = vmatpush1.bf16.msra.mxu0 %v2577
        %2603 = vmatprep.subr.bf16.mxu0 %v2576
        %2604 = vmatpush1.bf16.msra.mxu0 %v2575
        %2605 = vmatprep.subr.bf16.mxu0 %v2574
        %2606 = vmatpush1.bf16.msra.mxu0 %v2573
        %2607 = vmatprep.subr.bf16.mxu0 0
        %2608 = vmatpush2.bf16.msra.mxu0 0
        %2609 = vmatprep.subr.bf16.mxu0 0
        %2610 = vmatpush2.bf16.msra.mxu0 0
        %2611 = vmatprep.subr.bf16.mxu0 0
        %2612 = vmatpush2.bf16.msra.mxu0 0
        %2613 = vmatprep.subr.bf16.mxu0 0
        %2614 = vmatpush2.bf16.msra.mxu0 0
        %2615 = vmatprep.subr.bf16.mxu0 0
        %2616 = vmatpush2.bf16.msra.mxu0 0
        %2617 = vmatprep.subr.bf16.mxu0 0
        %2618 = vmatpush2.bf16.msra.mxu0 0
        %2619 = vmatprep.subr.bf16.mxu0 0
        %2620 = vmatpush2.bf16.msra.mxu0 0
        %2621 = vmatprep.subr.bf16.mxu0 0
        %2622 = vmatpush2.bf16.msra.mxu0 0
        %2623 = vmatprep.mubr.bf16.mxu0 0
        %2624 = vmatmul.mubr.bf16.gmra.mxu0 %v2586
        %v2625 = vpop.f32.mrf.mxu0
        %v2626 = vadd.f32 %v2528, %v2625
        %v2627 = vpop.f32.mrf.mxu0
        %v2628 = vadd.f32 %v2528, %v2627
        %v2629 = vpop.f32.mrf.mxu0
        %v2630 = vadd.f32 %v2533, %v2629
        %v2631 = vpop.f32.mrf.mxu0
        %v2632 = vadd.f32 %v2533, %v2631
        %2633 = vmatprep.mubr.bf16.mxu0 0
        %2634 = vmatmul.mubr.bf16.gmra.mxu0 %v2589
        %v2635 = vpop.f32.mrf.mxu0
        %v2636 = vadd.f32 %v2538, %v2635
        %v2637 = vpop.f32.mrf.mxu0
        %v2638 = vadd.f32 %v2538, %v2637
        %v2639 = vpop.f32.mrf.mxu0
        %v2640 = vadd.f32 %v2543, %v2639
        %v2641 = vpop.f32.mrf.mxu0
        %v2642 = vadd.f32 %v2543, %v2641
        %2643 = vdwg.mxu0
        %v2644 = vadd.f32 %v2626, %v2628
        %2645 = vadd.xlane.f32.xlu0 %v2644
        %v2646 = vpop.xlane.xlu0 %2645
        %v2647 = vadd.f32 %v2630, %v2632
        %2648 = vadd.xlane.f32.xlu0 %v2647
        %v2649 = vpop.xlane.xlu0 %2648
        %v2650 = vadd.f32 %v2636, %v2638
        %2651 = vadd.xlane.f32.xlu0 %v2650
        %v2652 = vpop.xlane.xlu0 %2651
        %v2653 = vadd.f32 %v2640, %v2642
        %2654 = vadd.xlane.f32.xlu0 %v2653
        %v2655 = vpop.xlane.xlu0 %2654
        %v2656 = vmul.f32 %v2626, %v2626
        %v2657 = vmul.f32 %v2628, %v2628
        %v2658 = vmul.f32 %v2630, %v2630
        %v2659 = vmul.f32 %v2632, %v2632
        %v2660 = vmul.f32 %v2636, %v2636
        %v2661 = vmul.f32 %v2638, %v2638
        %v2662 = vmul.f32 %v2640, %v2640
        %v2663 = vmul.f32 %v2642, %v2642
        %v2664 = vadd.f32 %v2656, %v2657
        %2665 = vadd.xlane.f32.xlu0 %v2664
        %v2666 = vpop.xlane.xlu0 %2665
        %v2667 = vadd.f32 %v2658, %v2659
        %2668 = vadd.xlane.f32.xlu0 %v2667
        %v2669 = vpop.xlane.xlu0 %2668
        %v2670 = vadd.f32 %v2660, %v2661
        %2671 = vadd.xlane.f32.xlu0 %v2670
        %v2672 = vpop.xlane.xlu0 %2671
        %v2673 = vadd.f32 %v2662, %v2663
        %2674 = vadd.xlane.f32.xlu0 %v2673
        %v2675 = vpop.xlane.xlu0 %2674
        %vm2676 = vcmask 7168
        %v2677 = vsel %vm2676, %v2646, %v2666
        %v2678 = vsel %vm2676, %v2649, %v2669
        %v2679 = vsel %vm2676, %v2652, %v2672
        %v2680 = vsel %vm2676, %v2655, %v2675
        %v2681 = vld [vmem:[%s3] sm:$0xff]
        %v2682 = vld [vmem:[%s3 + $0x8] sm:$0xff]
        %v2683 = vld [vmem:[%s3 + $0x10] sm:$0xff]
        %v2684 = vld [vmem:[%s3 + $0x18] sm:$0xff]
        %v2686 = vsel %vm503, %v2681, 0
        %v2689 = vsel %vm503, %v2682, 0
        %v2692 = vsel %vm503, %v2683, 0
        %v2695 = vsel %vm503, %v2684, 0
        %2697 = vmatprep.subr.mxu0 0.0
        %2698 = vmatpush1.msra.mxu0 0.0
        %2699 = vmatprep.subr.mxu0 0.0
        %2700 = vmatpush1.msra.mxu0 0.0
        %2701 = vmatprep.subr.mxu0 0.0
        %2702 = vmatpush1.msra.mxu0 0.0
        %2703 = vmatprep.subr.mxu0 0.0
        %2704 = vmatpush1.msra.mxu0 0.0
        %2705 = vmatprep.subr.mxu0 0.0
        %2706 = vmatpush1.msra.mxu0 0.0
        %2707 = vmatprep.subr.mxu0 0.0
        %2708 = vmatpush1.msra.mxu0 0.0
        %2709 = vmatprep.subr.mxu0 0.0
        %2710 = vmatpush1.msra.mxu0 0.0
        %2711 = vmatprep.subr.mxu0 0.0
        %2712 = vmatpush1.msra.mxu0 0.0
        %2713 = vmatprep.subr.mxu0 0.0
        %2714 = vmatpush1.msra.mxu0 0.0
        %2715 = vmatprep.subr.mxu0 0.0
        %2716 = vmatpush1.msra.mxu0 0.0
        %2717 = vmatprep.subr.mxu0 0.0
        %2718 = vmatpush1.msra.mxu0 0.0
        %2719 = vmatprep.subr.mxu0 0.0
        %2720 = vmatpush1.msra.mxu0 0.0
        %2721 = vmatprep.subr.mxu0 0.0
        %2722 = vmatpush1.msra.mxu0 %v2680
        %2723 = vmatprep.subr.mxu0 0.0
        %2724 = vmatpush1.msra.mxu0 %v2679
        %2725 = vmatprep.subr.mxu0 0.0
        %2726 = vmatpush1.msra.mxu0 %v2678
        %2727 = vmatprep.subr.mxu0 0.0
        %2728 = vmatpush1.msra.mxu0 %v2677
        %2729 = vmatprep.subr.mxu0 0.0
        %2730 = vmatpush2.msra.mxu0 0.0
        %2731 = vmatprep.subr.mxu0 0.0
        %2732 = vmatpush2.msra.mxu0 0.0
        %2733 = vmatprep.subr.mxu0 0.0
        %2734 = vmatpush2.msra.mxu0 0.0
        %2735 = vmatprep.subr.mxu0 0.0
        %2736 = vmatpush2.msra.mxu0 0.0
        %2737 = vmatprep.subr.mxu0 0.0
        %2738 = vmatpush2.msra.mxu0 0.0
        %2739 = vmatprep.subr.mxu0 0.0
        %2740 = vmatpush2.msra.mxu0 0.0
        %2741 = vmatprep.subr.mxu0 0.0
        %2742 = vmatpush2.msra.mxu0 0.0
        %2743 = vmatprep.subr.mxu0 0.0
        %2744 = vmatpush2.msra.mxu0 0.0
        %2745 = vmatprep.subr.mxu0 0.0
        %2746 = vmatpush2.msra.mxu0 0.0
        %2747 = vmatprep.subr.mxu0 0.0
        %2748 = vmatpush2.msra.mxu0 0.0
        %2749 = vmatprep.subr.mxu0 0.0
        %2750 = vmatpush2.msra.mxu0 0.0
        %2751 = vmatprep.subr.mxu0 0.0
        %2752 = vmatpush2.msra.mxu0 0.0
        %2753 = vmatprep.subr.mxu0 0.0
        %2754 = vmatpush2.msra.mxu0 0.0
        %2755 = vmatprep.subr.mxu0 0.0
        %2756 = vmatpush2.msra.mxu0 0.0
        %2757 = vmatprep.subr.mxu0 0.0
        %2758 = vmatpush2.msra.mxu0 0.0
        %2759 = vmatprep.subr.mxu0 0.0
        %2760 = vmatpush2.msra.mxu0 0.0
        %2761 = vmatprep.mubr.f32.mxu0 0.0
        %2762 = vmatmul.mubr.f32.gmra.mxu0 %v2686
        %v2763 = vpop.f32.mrf.mxu0
        %v2764 = vadd.f32 0.0, %v2763
        %v2765 = vpop.f32.mrf.mxu0
        %2766 = vmatprep.mubr.f32.mxu0 0.0
        %2767 = vmatmul.mubr.f32.gmra.mxu0 %v2689
        %v2768 = vpop.f32.mrf.mxu0
        %v2769 = vadd.f32 0.0, %v2768
        %v2770 = vpop.f32.mrf.mxu0
        %2771 = vmatprep.mubr.f32.mxu0 0.0
        %2772 = vmatmul.mubr.f32.gmra.mxu0 %v2692
        %v2773 = vpop.f32.mrf.mxu0
        %v2774 = vadd.f32 0.0, %v2773
        %v2775 = vpop.f32.mrf.mxu0
        %2776 = vmatprep.mubr.f32.mxu0 0.0
        %2777 = vmatmul.mubr.f32.gmra.mxu0 %v2695
        %v2778 = vpop.f32.mrf.mxu0
        %v2779 = vadd.f32 0.0, %v2778
        %v2780 = vpop.f32.mrf.mxu0
        %2781 = vdwg.mxu0
        %v2782 = vmul.f32 %v2764, %v2764
        %v2783 = vmul.f32 %v2769, %v2769
        %v2784 = vmul.f32 %v2774, %v2774
        %v2785 = vmul.f32 %v2779, %v2779
        %2790 = vrot.lane.b32.xlu0 %v2782, 1
        %v2791 = vpop.permute.xlu0 %2790
        %2792 = vrot.lane.b32.xlu0 %v2783, 1
        %v2793 = vpop.permute.xlu0 %2792
        %2794 = vrot.lane.b32.xlu0 %v2784, 1
        %v2795 = vpop.permute.xlu0 %2794
        %2796 = vrot.lane.b32.xlu0 %v2785, 1
        %v2797 = vpop.permute.xlu0 %2796
        %v2802 = vsub.f32 %v2764, %v2791
        %v2803 = vsub.f32 %v2769, %v2793
        %v2804 = vsub.f32 %v2774, %v2795
        %v2805 = vsub.f32 %v2779, %v2797
        %v2806 = vmax.f32 %v2802, 0.0
        %v2807 = vmax.f32 %v2803, 0.0
        %v2808 = vmax.f32 %v2804, 0.0
        %v2809 = vmax.f32 %v2805, 0.0
        %v2810 = vadd.f32 %v2806, 1e-05
        %v2811 = vadd.f32 %v2807, 1e-05
        %v2812 = vadd.f32 %v2808, 1e-05
        %v2813 = vadd.f32 %v2809, 1e-05
        %v2814 = vrsqrt.pop %v2810
        %v2815 = vrsqrt.pop %v2811
        %v2816 = vrsqrt.pop %v2812
        %v2817 = vrsqrt.pop %v2813
        %v2818 = vmul.f32 %v2814, %v2511
        %v2819 = vmul.f32 %v2815, %v2512
        %v2820 = vmul.f32 %v2816, %v2513
        %v2821 = vmul.f32 %v2817, %v2514
        %2826 = vrot.lane.b32.xlu0 %v2818, 127
        %v2827 = vpop.permute.xlu0 %2826
        %2828 = vrot.lane.b32.xlu0 %v2819, 127
        %v2829 = vpop.permute.xlu0 %2828
        %2830 = vrot.lane.b32.xlu0 %v2820, 127
        %v2831 = vpop.permute.xlu0 %2830
        %2832 = vrot.lane.b32.xlu0 %v2821, 127
        %v2833 = vpop.permute.xlu0 %2832
        %v2838 = vmul.f32 %v2764, %v2827
        %v2839 = vmul.f32 %v2769, %v2829
        %v2840 = vmul.f32 %v2774, %v2831
        %v2841 = vmul.f32 %v2779, %v2833
        %2846 = vrot.lane.b32.xlu0 %v2838, 2
        %v2847 = vpop.permute.xlu0 %2846
        %2848 = vrot.lane.b32.xlu0 %v2839, 2
        %v2849 = vpop.permute.xlu0 %2848
        %2850 = vrot.lane.b32.xlu0 %v2840, 2
        %v2851 = vpop.permute.xlu0 %2850
        %2852 = vrot.lane.b32.xlu0 %v2841, 2
        %v2853 = vpop.permute.xlu0 %2852
        %v2858 = vsub.f32 %v2511, %v2847
        %v2859 = vsub.f32 %v2512, %v2849
        %v2860 = vsub.f32 %v2513, %v2851
        %v2861 = vsub.f32 %v2514, %v2853
        %2862 = vset.pattern.permute.xlu0 1
        %2863 = vperm.xlu0 %2862, %v2818
        %v2864 = vpop.permute.xlu0 %2863
        %2866 = vset.pattern.permute.xlu0 1
        %2867 = vperm.xlu0 %2866, %v2819
        %v2868 = vpop.permute.xlu0 %2867
        %2870 = vset.pattern.permute.xlu0 1
        %2871 = vperm.xlu0 %2870, %v2820
        %v2872 = vpop.permute.xlu0 %2871
        %2874 = vset.pattern.permute.xlu0 1
        %2875 = vperm.xlu0 %2874, %v2821
        %v2876 = vpop.permute.xlu0 %2875
        %v2878 = vmul.f32 %v2626, %v2864
        %v2879 = vmul.f32 %v2628, %v2864
        %v2880 = vmul.f32 %v2630, %v2868
        %v2881 = vmul.f32 %v2632, %v2868
        %v2882 = vmul.f32 %v2636, %v2872
        %v2883 = vmul.f32 %v2638, %v2872
        %v2884 = vmul.f32 %v2640, %v2876
        %v2885 = vmul.f32 %v2642, %v2876
        %2887 = vset.pattern.permute.xlu0 2
        %2888 = vperm.xlu0 %2887, %v2858
        %v2889 = vpop.permute.xlu0 %2888
        %2892 = vset.pattern.permute.xlu0 2
        %2893 = vperm.xlu0 %2892, %v2859
        %v2894 = vpop.permute.xlu0 %2893
        %2897 = vset.pattern.permute.xlu0 2
        %2898 = vperm.xlu0 %2897, %v2860
        %v2899 = vpop.permute.xlu0 %2898
        %2902 = vset.pattern.permute.xlu0 2
        %2903 = vperm.xlu0 %2902, %v2861
        %v2904 = vpop.permute.xlu0 %2903
        %v2906 = vadd.f32 %v2878, %v2889
        %v2907 = vadd.f32 %v2879, %v2889
        %v2908 = vadd.f32 %v2880, %v2894
        %v2909 = vadd.f32 %v2881, %v2894
        %v2910 = vadd.f32 %v2882, %v2899
        %v2911 = vadd.f32 %v2883, %v2899
        %v2912 = vadd.f32 %v2884, %v2904
        %v2913 = vadd.f32 %v2885, %v2904
        %v2914 = vmax.f32 %v2906, 0.0
        %v2915 = vmax.f32 %v2907, 0.0
        %v2916 = vmax.f32 %v2908, 0.0
        %v2917 = vmax.f32 %v2909, 0.0
        %v2918 = vmax.f32 %v2910, 0.0
        %v2919 = vmax.f32 %v2911, 0.0
        %v2920 = vmax.f32 %v2912, 0.0
        %v2921 = vmax.f32 %v2913, 0.0
        %2922 = vst [vmem:[%s230] sm:$0xff] %v2914
        %2923 = vst [vmem:[%s230 + $0x8] sm:$0xff] %v2915
        %2924 = vst [vmem:[%s230 + $0x10] sm:$0xff] %v2916
        %2925 = vst [vmem:[%s230 + $0x18] sm:$0xff] %v2917
        %2926 = vst [vmem:[%s230 + $0x20] sm:$0xff] %v2918
        %2927 = vst [vmem:[%s230 + $0x28] sm:$0xff] %v2919
        %2928 = vst [vmem:[%s230 + $0x30] sm:$0xff] %v2920
        %2929 = vst [vmem:[%s230 + $0x38] sm:$0xff] %v2921
        %s2930 = sand.u32 %s119, 1
        %s2931 = scalar_lea.sflag [#allocation6], %s2930
        %s2932 = sand.u32 %s119, 1
        %s2933 = smul.addr %s2932, 64
        %s2934 = scalar_lea.vmem [#allocation9], %s2933
        // Predicated region
        $region45: #{tpu_custom_call.1} parent=35 // pred_check
          %p2935 = pneg %p129
        $region46: #{tpu_custom_call.1} parent=35 // pred_check_branch
          %2937 = sbr.rel (%p2935) target = $region48
        $region47: #{tpu_custom_call.1} parent=35 // pred_region
          %s2939 = ssub.s32 1024, 1024
          %2940 = vsyncadd %s2931, %s2939
          %s2941 = smul.addr %s22, 8
          %s2942 = smul.addr %s2941, 128
          %s2943 = scalar_lea.hbm %s4, %s2942
          %s2944 = sshll.u32 %s2934, 4
          %s2945 = int_to_ptr.vmem [resolvable:$true] %s2944
          %2950 = dma.vmem_to_hbm [thread:$0]  %s2945, 1024, %s2943, %s2931, 256, 256, 16
        $region48: #{tpu_custom_call.1} parent=35 // pred_fallthru
          _
      $region36: #{tpu_custom_call.1} parent=5 // pred_fallthru
        _
      %p2951 = scmp.le.s32.totalorder 2, %s17
      // Predicated region
      $region49: #{tpu_custom_call.1} parent=5 // pred_check
        %p2952 = pneg %p2951
      $region50: #{tpu_custom_call.1} parent=5 // pred_check_branch
        %2954 = sbr.rel (%p2952) target = $region52
      $region51: #{tpu_custom_call.1} parent=5 // pred_region
        %s2955 = ssub.s32 %s17, 2
        // Predicated region
        $region53: #{tpu_custom_call.1} parent=51 // pred_check
          %p2956 = pneg %p135
        $region54: #{tpu_custom_call.1} parent=51 // pred_check_branch
          %2958 = sbr.rel (%p2956) target = $region56
        $region55: #{tpu_custom_call.1} parent=51 // pred_region
          %s2959 = sand.u32 %s120, 1
          %s2960 = scalar_lea.sflag [#allocation6], %s2959
          %s2961 = sand.u32 %s120, 1
          %s2962 = smul.addr %s2961, 64
          %s2963 = scalar_lea.vmem [#allocation9], %s2962
          %2964 = dma.done %s2960, 1024
        $region56: #{tpu_custom_call.1} parent=51 // pred_fallthru
          _
      $region52: #{tpu_custom_call.1} parent=5 // pred_fallthru
        _
    $region6: #{tpu_custom_call.1} parent=1 // loop_footer
      %s21 = sadd.s32 1, %s17
    $region7: #{tpu_custom_call.1} parent=1 // loop_footer_branch
      %16 = sbr.rel target = $region3
    $region8: #{tpu_custom_call.1} parent=1 // loop_exit
      _
    %2965 = vsyncpa [#allocation5], 1
    %s2966 = scalar_lea.sflag [#allocation5], 1
    %2967 = vsyncpa %s2966, 1
    %2968 = vsyncpa [#allocation8], 1
    %2969 = vsyncpa [#allocation6], 1
    %s2970 = scalar_lea.sflag [#allocation6], 1
    %2971 = vsyncpa %s2970, 1

</llo_original>
